<compile_context>
chip_gen: v6e
topology: v6e:2x2x1
jax: 0.10.0
libtpu: 0.0.40
codegen_flags: <defaults>
</compile_context>

<pallas_src>
import functools

import jax
import jax.numpy as jnp
from jax import lax
from jax.experimental import pallas as pl
from jax.experimental.pallas import tpu as pltpu


# ----------------------------- helpers ---------------------------------------

def _softplus(x):
    # numerically stable softplus, elementwise (VPU/EUP ops only)
    return jnp.maximum(x, 0.0) + jnp.log1p(jnp.exp(-jnp.abs(x)))


def _round_up(x, m):
    return ((x + m - 1) // m) * m


# --------- kernel 1: tiled encoder + mean/log_var/reparam/occ_net head --------
# TODO(synk): SparseResidualEncoder2 (MinkowskiEngine sparse residual convs) has
# no clean Pallas equivalent; replaced by per-batch mean pooling + 2-layer MLP
# producing the same latent shape [B, latent].

def encoder_kernel(feat_ref, bid_ref, eps_ref,
                   ew1_ref, eb1_ref, ew2_ref, eb2_ref,
                   wm_ref, bm_ref, wv_ref, bv_ref,
                   ow0_ref, ob0_ref, owm_ref, obm_ref, ow3_ref, ob3_ref,
                   w1l_ref,
                   mean_ref, logvar_ref, occ_ref, mw1l_ref,
                   pooled_acc, cnt_acc):
    step = pl.program_id(0)

    @pl.when(step == 0)
    def _():
        pooled_acc[...] = jnp.zeros_like(pooled_acc)
        cnt_acc[...] = jnp.zeros_like(cnt_acc)

    feat = feat_ref[...]                             # [tile_n, Fin] f32
    bid = bid_ref[...]                               # [1, tile_n]  int32 (pad = -1)
    B = pooled_acc.shape[0]
    tile_n = feat.shape[0]

    # [B, tile_n] membership mask (int32 compare -> exact); pad rows match nothing.
    iota_b = lax.broadcasted_iota(jnp.int32, (B, tile_n), 0)
    mask = (iota_b == bid).astype(jnp.float32)

    pooled_acc[...] += jnp.dot(mask, feat, preferred_element_type=jnp.float32)
    cnt_acc[...] += jnp.sum(mask, axis=1, keepdims=True)

    @pl.when(step == pl.num_programs(0) - 1)
    def _():
        cnt = jnp.maximum(cnt_acc[...], 1.0)         # guard empty batches
        pooled = pooled_acc[...] / cnt               # per-batch mean pooling

        h = jnp.maximum(
            jnp.dot(pooled, ew1_ref[...], preferred_element_type=jnp.float32)
            + eb1_ref[...], 0.0)
        lat = jnp.dot(h, ew2_ref[...], preferred_element_type=jnp.float32) + eb2_ref[...]

        mean = jnp.dot(lat, wm_ref[...], preferred_element_type=jnp.float32) + bm_ref[...]
        log_var = jnp.dot(lat, wv_ref[...], preferred_element_type=jnp.float32) + bv_ref[...]
        # z = mean + exp(0.5 * log_var) * eps  (z only feeds occ_net, as in the spec)
        z = mean + jnp.exp(0.5 * log_var) * eps_ref[...]

        # occ_net: Softplus, Linear(L,64), Softplus, Linear(64,64),
        #          Softplus, Linear(64,64), Softplus, Linear(64,1)
        owm = owm_ref[...]                           # [128, 64] packed mid weights
        obm = obm_ref[...]                           # [2, 64]   packed mid biases
        ho = _softplus(z)
        ho = _softplus(jnp.dot(ho, ow0_ref[...], preferred_element_type=jnp.float32)
                       + ob0_ref[...])
        ho = _softplus(jnp.dot(ho, owm[0:64, :], preferred_element_type=jnp.float32)
                       + obm[0:1, :])
        ho = _softplus(jnp.dot(ho, owm[64:128, :], preferred_element_type=jnp.float32)
                       + obm[1:2, :])
        occ = jnp.dot(ho, ow3_ref[...], preferred_element_type=jnp.float32) + ob3_ref[...]

        mean_ref[...] = mean
        logvar_ref[...] = log_var
        occ_ref[...] = occ
        # folded latent half of the decoder's first layer: [B, dec_hidden]
        mw1l_ref[...] = jnp.dot(mean, w1l_ref[...], preferred_element_type=jnp.float32)


def run_encoder(feat_pad, bid_pad, eps, p, tile_n):
    n_pad, fin = feat_pad.shape
    B, L = eps.shape
    h_dec = p["dec_w1l"].shape[1]
    grid = (n_pad // tile_n,)

    res_args = (eps,
                p["enc_w1"], p["enc_b1"], p["enc_w2"], p["enc_b2"],
                p["mean_w"], p["mean_b"], p["lv_w"], p["lv_b"],
                p["occ_w0"], p["occ_b0"], p["occ_wmid"], p["occ_bmid"],
                p["occ_w3"], p["occ_b3"], p["dec_w1l"])

    in_specs = ([pl.BlockSpec((tile_n, fin), lambda i: (i, 0)),   # feat row-tile
                 pl.BlockSpec((1, tile_n), lambda i: (0, i))]     # batch-id tile
                + [pl.BlockSpec(a.shape, lambda i: (0, 0)) for a in res_args])

    out_shape = (jax.ShapeDtypeStruct((B, L), jnp.float32),       # mean
                 jax.ShapeDtypeStruct((B, L), jnp.float32),       # log_var
                 jax.ShapeDtypeStruct((B, 1), jnp.float32),       # occupancy
                 jax.ShapeDtypeStruct((B, h_dec), jnp.float32))   # mean @ dec_w1l
    out_specs = tuple(pl.BlockSpec(s.shape, lambda i: (0, 0)) for s in out_shape)

    return pl.pallas_call(
        encoder_kernel,
        out_shape=out_shape,
        grid=grid,
        in_specs=in_specs,
        out_specs=out_specs,
        scratch_shapes=[pltpu.VMEM((B, fin), jnp.float32),        # pooled sum
                        pltpu.VMEM((B, 1), jnp.float32)],         # per-batch counts
        compiler_params=pltpu.CompilerParams(
            dimension_semantics=("arbitrary",),
            vmem_limit_bytes=32 * 1024 * 1024),
    )(feat_pad, bid_pad, *res_args)


# -------------------- kernel 2: PointNet generator (row-tiled) ----------------
# TODO(synk): the internal PointNetGenerator architecture is not defined in the
# reference file; implemented as a per-point MLP on concat(noise, latent[batch]).

def decoder_kernel(noise_ref, mw1l_ref,
                   w1n_ref, b1_ref, w2_ref, b2_ref, w3_ref, b3_ref,
                   out_ref):
    nd = w1n_ref.shape[0]
    B = mw1l_ref.shape[0]
    T = noise_ref.shape[0]

    x = noise_ref[...]                               # [T, nd+1]  (last col = batch id)
    noise = x[:, :nd]                                # [T, nd] f32
    bid = x[:, nd:].astype(jnp.int32)                # [T, 1]  (pad rows = -1)

    # gather the folded latent contribution: onehot [T,B] @ mw1l [B,Hd]
    iota_b = lax.broadcasted_iota(jnp.int32, (T, B), 1)
    onehot = (iota_b == bid).astype(jnp.float32)
    lat = jnp.dot(onehot, mw1l_ref[...], preferred_element_type=jnp.float32)

    h = jnp.maximum(
        jnp.dot(noise.astype(jnp.bfloat16), w1n_ref[...],
                preferred_element_type=jnp.float32) + lat + b1_ref[...], 0.0)
    h = jnp.maximum(
        jnp.dot(h.astype(jnp.bfloat16), w2_ref[...],
                preferred_element_type=jnp.float32) + b2_ref[...], 0.0)
    # narrow [T, 3] writeback (real output width) instead of a 128-wide slab
    out_ref[...] = (jnp.dot(h.astype(jnp.bfloat16), w3_ref[...],
                            preferred_element_type=jnp.float32) + b3_ref[...])


def run_decoder(noise_cat, mw1l, p, tile_m):
    n_pad, nc = noise_cat.shape                      # nc = noise_dim + 1
    nd = nc - 1
    B, hd = mw1l.shape
    grid = (n_pad // tile_m,)

    flops = 2 * n_pad * (B * hd + nd * hd + hd * hd + hd * 3)
    bytes_accessed = (n_pad * nc * 4 + n_pad * 3 * 4 + B * hd * 4
                      + (nd * hd + hd * hd + hd * 3) * 2 + (3 * hd + 3) * 4)

    return pl.pallas_call(
        decoder_kernel,
        out_shape=jax.ShapeDtypeStruct((n_pad, 3), jnp.float32),
        grid=grid,
        in_specs=[
            pl.BlockSpec((tile_m, nc), lambda i: (i, 0)),          # noise+bid tile
            pl.BlockSpec(mw1l.shape, lambda i: (0, 0)),            # folded latent
            pl.BlockSpec(p["dec_w1n"].shape, lambda i: (0, 0)),    # weights resident
            pl.BlockSpec(p["dec_b1"].shape, lambda i: (0, 0)),
            pl.BlockSpec(p["dec_w2"].shape, lambda i: (0, 0)),
            pl.BlockSpec(p["dec_b2"].shape, lambda i: (0, 0)),
            pl.BlockSpec(p["dec_w3"].shape, lambda i: (0, 0)),
            pl.BlockSpec(p["dec_b3"].shape, lambda i: (0, 0)),
        ],
        out_specs=pl.BlockSpec((tile_m, 3), lambda i: (i, 0)),
        compiler_params=pltpu.CompilerParams(
            dimension_semantics=("parallel",),
            vmem_limit_bytes=32 * 1024 * 1024),
        cost_estimate=pl.CostEstimate(flops=flops, transcendentals=0,
                                      bytes_accessed=bytes_accessed),
    )(noise_cat, mw1l,
      p["dec_w1n"], p["dec_b1"], p["dec_w2"], p["dec_b2"],
      p["dec_w3"], p["dec_b3"])


# ----------------------------- parameters -------------------------------------

def init_params(key, fin, latent, noise_dim, enc_hidden=64, dec_hidden=128):
    def lin(k, i, o, scale=0.1, dtype=jnp.float32):
        w = (scale * jax.random.normal(k, (i, o), jnp.float32)).astype(dtype)
        return w, jnp.zeros((1, o), jnp.float32)

    ks = jax.random.split(key, 12)
    p = {}
    p["enc_w1"], p["enc_b1"] = lin(ks[0], fin, enc_hidden)
    p["enc_w2"], p["enc_b2"] = lin(ks[1], enc_hidden, latent)
    p["mean_w"], p["mean_b"] = lin(ks[2], latent, latent)
    p["lv_w"],   p["lv_b"]   = lin(ks[3], latent, latent)
    p["occ_w0"], p["occ_b0"] = lin(ks[4], latent, 64)
    w1, b1 = lin(ks[5], 64, 64)
    w2, b2 = lin(ks[6], 64, 64)
    p["occ_wmid"] = jnp.concatenate([w1, w2], axis=0)            # [128, 64]
    p["occ_bmid"] = jnp.concatenate([b1, b2], axis=0)            # [2, 64]
    p["occ_w3"], p["occ_b3"] = lin(ks[7], 64, 1)
    # decoder: first layer split (noise / latent halves); the latent half is
    # folded with `mean` inside the encoder kernel, so it stays f32.
    p["dec_w1n"], p["dec_b1"] = lin(ks[8], noise_dim, dec_hidden, dtype=jnp.bfloat16)
    p["dec_w1l"], _           = lin(ks[9], latent, dec_hidden)   # f32
    p["dec_w2"],  p["dec_b2"] = lin(ks[10], dec_hidden, dec_hidden, dtype=jnp.bfloat16)
    p["dec_w3"],  p["dec_b3"] = lin(ks[11], dec_hidden, 3, dtype=jnp.bfloat16)
    return p


# ------------------------------- forward --------------------------------------

@functools.partial(jax.jit, static_argnames=("coord_conv", "spatial_size",
                                              "num_batches", "noise_dim",
                                              "enc_tile_n", "dec_tile_m"))
def _vae_forward_one(x, params, k_eps, k_pts, *, coord_conv, spatial_size,
                     num_batches, noise_dim, enc_tile_n, dec_tile_m):
    coords, features = x[:, :4], x[:, 4:]
    if coord_conv:
        half = float(spatial_size) / 2.0
        normalized_coords = (coords[:, 1:4] - half) / half
        features = jnp.concatenate([normalized_coords, features], axis=1)

    N = x.shape[0]
    B = num_batches
    L = params["mean_w"].shape[1]
    batch_ids = coords[:, 0].astype(jnp.int32)

    # --- tiled encoder + reparameterization + occ_net head (single Pallas call)
    tn = min(enc_tile_n, _round_up(N, 128))          # multiple of 128 (lane axis of bid)
    n_pad_e = _round_up(N, tn)
    feat_pad = jnp.pad(features, ((0, n_pad_e - N), (0, 0)))
    bid_pad_e = jnp.pad(batch_ids, (0, n_pad_e - N), constant_values=-1)[None, :]

    eps = jax.random.normal(k_eps, (B, L), jnp.float32)
    mean, log_var, occupancy, mw1l = run_encoder(feat_pad, bid_pad_e, eps, params, tn)

    # --- per-point noise (counts[b] points of dim noise_dim per batch)
    points = jax.random.normal(k_pts, (N, noise_dim), jnp.float32)

    # --- row-tiled decoder (batch-id merged into the streamed noise array;
    #     padded rows carry bid=-1 -> zero latent, garbage output sliced off)
    tm = min(dec_tile_m, _round_up(N, 8))
    n_pad_d = _round_up(N, tm)
    pts_pad = jnp.pad(points, ((0, n_pad_d - N), (0, 0)))
    bid_pad_d = jnp.pad(batch_ids, (0, n_pad_d - N),
                        constant_values=-1).astype(jnp.float32)[:, None]
    noise_cat = jnp.concatenate([pts_pad, bid_pad_d], axis=1)    # [n_pad_d, nd+1]

    dec_out = run_decoder(noise_cat, mw1l, params, tm)           # [n_pad_d, 3]
    points_gen = dec_out[:N, :]

    return mean, log_var, occupancy, points, batch_ids, points_gen


def vae_forward(input_list, params, key, cfg):
    out = {"occupancy": [], "points": [], "batch": [], "latent": [],
           "log_var": [], "points_gen": []}
    for x in input_list:
        key, k_eps, k_pts = jax.random.split(key, 3)
        mean, log_var, occ, points, batch_ids, points_gen = _vae_forward_one(
            x, params, k_eps, k_pts,
            coord_conv=cfg["coordConv"], spatial_size=cfg["spatial_size"],
            num_batches=cfg["num_batches"], noise_dim=cfg["noise_dim"],
            enc_tile_n=cfg.get("encoder_tile_n", 2048),
            dec_tile_m=cfg.get("decoder_tile_m", 1024))
        out["occupancy"].append(occ)
        out["points"].append(points)
        out["batch"].append(batch_ids)
        out["latent"].append(mean)
        out["log_var"].append(log_var)
        out["points_gen"].append(points_gen)
    return out


# --------------------------------- main ----------------------------------------

if __name__ == "__main__":
    key = jax.random.PRNGKey(0)
    k_coord, k_feat, k_param, k_fwd = jax.random.split(key, 4)

    # config (mirrors cfg['vae'] defaults used in the module)
    cfg = dict(coordConv=True, spatial_size=32, latent_size=32,
               noise_dim=10, num_batches=2,
               encoder_tile_n=2048, decoder_tile_m=1024)

    # sparse-tensor style input: [N, 4 + F]; counts = [12, 20] -> N = 32
    counts = [12, 20]
    N = sum(counts)
    F_raw = 1
    batch_col = jnp.concatenate([jnp.full((c,), b, jnp.float32)
                                 for b, c in enumerate(counts)])[:, None]
    xyz = jax.random.randint(k_coord, (N, 3), 0, cfg["spatial_size"]).astype(jnp.float32)
    feat = jax.random.normal(k_feat, (N, F_raw), jnp.float32)
    x = jnp.concatenate([batch_col, xyz, feat], axis=1)                   # [32, 5]

    fin = 3 + F_raw if cfg["coordConv"] else F_raw
    params = init_params(k_param, fin, cfg["latent_size"], cfg["noise_dim"])

    out = vae_forward([x], params, k_fwd, cfg)
    jax.block_until_ready(out)

    assert out["occupancy"][0].shape == (cfg["num_batches"], 1)
    assert out["latent"][0].shape == (cfg["num_batches"], cfg["latent_size"])
    assert out["log_var"][0].shape == (cfg["num_batches"], cfg["latent_size"])
    assert out["points"][0].shape == (N, cfg["noise_dim"])
    assert out["points_gen"][0].shape == (N, 3)
    assert bool(jnp.all(jnp.isfinite(out["points_gen"][0])))
    assert bool(jnp.all(jnp.isfinite(out["latent"][0])))
    assert bool(jnp.all(jnp.isfinite(out["occupancy"][0])))
    print("KERNEL_OK")
</pallas_src>

<mosaic_0001>
module attributes {stable_mosaic.version = 11 : i64} {
  func.func @encoder_kernel(%arg0: i32, %arg1: memref<128x4xf32, #tpu.memory_space<vmem>>, %arg2: memref<1x128xi32, #tpu.memory_space<vmem>>, %arg3: memref<2x32xf32, #tpu.memory_space<vmem>>, %arg4: memref<4x64xf32, #tpu.memory_space<vmem>>, %arg5: memref<1x64xf32, #tpu.memory_space<vmem>>, %arg6: memref<64x32xf32, #tpu.memory_space<vmem>>, %arg7: memref<1x32xf32, #tpu.memory_space<vmem>>, %arg8: memref<32x32xf32, #tpu.memory_space<vmem>>, %arg9: memref<1x32xf32, #tpu.memory_space<vmem>>, %arg10: memref<32x32xf32, #tpu.memory_space<vmem>>, %arg11: memref<1x32xf32, #tpu.memory_space<vmem>>, %arg12: memref<32x64xf32, #tpu.memory_space<vmem>>, %arg13: memref<1x64xf32, #tpu.memory_space<vmem>>, %arg14: memref<128x64xf32, #tpu.memory_space<vmem>>, %arg15: memref<2x64xf32, #tpu.memory_space<vmem>>, %arg16: memref<64x1xf32, #tpu.memory_space<vmem>>, %arg17: memref<1x1xf32, #tpu.memory_space<vmem>>, %arg18: memref<32x128xf32, #tpu.memory_space<vmem>>, %arg19: memref<2x32xf32, #tpu.memory_space<vmem>>, %arg20: memref<2x32xf32, #tpu.memory_space<vmem>>, %arg21: memref<2x1xf32, #tpu.memory_space<vmem>>, %arg22: memref<2x128xf32, #tpu.memory_space<vmem>>, %arg23: memref<2x4xf32, #tpu.memory_space<vmem>>, %arg24: memref<2x1xf32, #tpu.memory_space<vmem>>) attributes {dimension_semantics = [#tpu.dimension_semantics<arbitrary>], iteration_bounds = array<i64: 1>, scalar_prefetch = 0 : i64, scratch_operands = 2 : i64, tpu.core_type = #tpu.core_type<tc>, window_params = [{transform_indices = @transform_0, window_bounds = array<i64: 128, 4>}, {transform_indices = @transform_1, window_bounds = array<i64: 1, 128>}, {pipeline_mode = #tpu.pipeline_mode<synchronous>, transform_indices = @transform_2, window_bounds = array<i64: 2, 32>}, {pipeline_mode = #tpu.pipeline_mode<synchronous>, transform_indices = @transform_3, window_bounds = array<i64: 4, 64>}, {pipeline_mode = #tpu.pipeline_mode<synchronous>, transform_indices = @transform_4, window_bounds = array<i64: 1, 64>}, {pipeline_mode = #tpu.pipeline_mode<synchronous>, transform_indices = @transform_5, window_bounds = array<i64: 64, 32>}, {pipeline_mode = #tpu.pipeline_mode<synchronous>, transform_indices = @transform_6, window_bounds = array<i64: 1, 32>}, {pipeline_mode = #tpu.pipeline_mode<synchronous>, transform_indices = @transform_7, window_bounds = array<i64: 32, 32>}, {pipeline_mode = #tpu.pipeline_mode<synchronous>, transform_indices = @transform_8, window_bounds = array<i64: 1, 32>}, {pipeline_mode = #tpu.pipeline_mode<synchronous>, transform_indices = @transform_9, window_bounds = array<i64: 32, 32>}, {pipeline_mode = #tpu.pipeline_mode<synchronous>, transform_indices = @transform_10, window_bounds = array<i64: 1, 32>}, {pipeline_mode = #tpu.pipeline_mode<synchronous>, transform_indices = @transform_11, window_bounds = array<i64: 32, 64>}, {pipeline_mode = #tpu.pipeline_mode<synchronous>, transform_indices = @transform_12, window_bounds = array<i64: 1, 64>}, {pipeline_mode = #tpu.pipeline_mode<synchronous>, transform_indices = @transform_13, window_bounds = array<i64: 128, 64>}, {pipeline_mode = #tpu.pipeline_mode<synchronous>, transform_indices = @transform_14, window_bounds = array<i64: 2, 64>}, {pipeline_mode = #tpu.pipeline_mode<synchronous>, transform_indices = @transform_15, window_bounds = array<i64: 64, 1>}, {pipeline_mode = #tpu.pipeline_mode<synchronous>, transform_indices = @transform_16, window_bounds = array<i64: 1, 1>}, {pipeline_mode = #tpu.pipeline_mode<synchronous>, transform_indices = @transform_17, window_bounds = array<i64: 32, 128>}, {pipeline_mode = #tpu.pipeline_mode<synchronous>, transform_indices = @transform_18, window_bounds = array<i64: 2, 32>}, {pipeline_mode = #tpu.pipeline_mode<synchronous>, transform_indices = @transform_19, window_bounds = array<i64: 2, 32>}, {pipeline_mode = #tpu.pipeline_mode<synchronous>, transform_indices = @transform_20, window_bounds = array<i64: 2, 1>}, {pipeline_mode = #tpu.pipeline_mode<synchronous>, transform_indices = @transform_21, window_bounds = array<i64: 2, 128>}]} {
    %c0_i32 = arith.constant 0 : i32
    %0 = arith.cmpi eq, %arg0, %c0_i32 : i32
    %1 = arith.extui %0 : i1 to i32
    %c0_i32_0 = arith.constant 0 : i32
    %2 = arith.cmpi ne, %1, %c0_i32_0 : i32
    scf.if %2 {
      %cst_15 = arith.constant 0.000000e+00 : f32
      %22 = vector.broadcast %cst_15 : f32 to vector<2x4xf32>
      %c0_16 = arith.constant 0 : index
      %c0_17 = arith.constant 0 : index
      %23 = vector.load %arg23[%c0_16, %c0_17] : memref<2x4xf32, #tpu.memory_space<vmem>>, vector<2x4xf32>
      tpu.vector_store %arg23[%c0_16, %c0_17], %22 {strides = array<i32>} : memref<2x4xf32, #tpu.memory_space<vmem>>, vector<2x4xf32>,
      %cst_18 = arith.constant 0.000000e+00 : f32
      %24 = vector.broadcast %cst_18 : f32 to vector<2x1xf32>
      %c0_19 = arith.constant 0 : index
      %c0_20 = arith.constant 0 : index
      %25 = vector.load %arg24[%c0_19, %c0_20] : memref<2x1xf32, #tpu.memory_space<vmem>>, vector<2x1xf32>
      tpu.vector_store %arg24[%c0_19, %c0_20], %24 {strides = array<i32>} : memref<2x1xf32, #tpu.memory_space<vmem>>, vector<2x1xf32>,
    } else {
    }
    %c0 = arith.constant 0 : index
    %c0_1 = arith.constant 0 : index
    %3 = vector.load %arg1[%c0, %c0_1] : memref<128x4xf32, #tpu.memory_space<vmem>>, vector<128x4xf32>
    %c0_2 = arith.constant 0 : index
    %c0_3 = arith.constant 0 : index
    %4 = vector.load %arg2[%c0_2, %c0_3] : memref<1x128xi32, #tpu.memory_space<vmem>>, vector<1x128xi32>
    %5 = tpu.iota {dimensions = array<i32: 0>} : vector<2x128xi32>
    %6 = vector.broadcast %4 : vector<1x128xi32> to vector<2x128xi32>
    %7 = arith.cmpi eq, %5, %6 : vector<2x128xi32>
    %8 = arith.extui %7 : vector<2x128xi1> to vector<2x128xi32>
    %9 = arith.sitofp %8 : vector<2x128xi32> to vector<2x128xf32>
    %c0_4 = arith.constant 0 : index
    %c0_5 = arith.constant 0 : index
    %10 = vector.load %arg23[%c0_4, %c0_5] : memref<2x4xf32, #tpu.memory_space<vmem>>, vector<2x4xf32>
    %cst = arith.constant dense<0.000000e+00> : vector<2x4xf32>
    %11 = tpu.matmul %9, %3, %cst {dimension_numbers = #tpu.dot_dimension_numbers<[1], [0], [0], [1], [0, 0, 1, 1], [], []>} : vector<2x128xf32>, vector<128x4xf32>, vector<2x4xf32> -> vector<2x4xf32>
    %12 = arith.addf %10, %11 : vector<2x4xf32>
    %c0_6 = arith.constant 0 : index
    %c0_7 = arith.constant 0 : index
    %13 = vector.load %arg23[%c0_6, %c0_7] : memref<2x4xf32, #tpu.memory_space<vmem>>, vector<2x4xf32>
    tpu.vector_store %arg23[%c0_6, %c0_7], %12 {strides = array<i32>} : memref<2x4xf32, #tpu.memory_space<vmem>>, vector<2x4xf32>,
    %c0_8 = arith.constant 0 : index
    %c0_9 = arith.constant 0 : index
    %14 = vector.load %arg24[%c0_8, %c0_9] : memref<2x1xf32, #tpu.memory_space<vmem>>, vector<2x1xf32>
    %cst_10 = arith.constant dense<0.000000e+00> : vector<2xf32>
    %15 = vector.multi_reduction <add>, %9, %cst_10 [1] : vector<2x128xf32> to vector<2xf32>
    %16 = vector.shape_cast %15 : vector<2xf32> to vector<2x1xf32>
    %17 = arith.addf %14, %16 : vector<2x1xf32>
    %c0_11 = arith.constant 0 : index
    %c0_12 = arith.constant 0 : index
    %18 = vector.load %arg24[%c0_11, %c0_12] : memref<2x1xf32, #tpu.memory_space<vmem>>, vector<2x1xf32>
    tpu.vector_store %arg24[%c0_11, %c0_12], %17 {strides = array<i32>} : memref<2x1xf32, #tpu.memory_space<vmem>>, vector<2x1xf32>,
    %c0_i32_13 = arith.constant 0 : i32
    %19 = arith.cmpi eq, %arg0, %c0_i32_13 : i32
    %20 = arith.extui %19 : i1 to i32
    %c0_i32_14 = arith.constant 0 : i32
    %21 = arith.cmpi ne, %20, %c0_i32_14 : i32
    scf.if %21 {
      %c0_15 = arith.constant 0 : index
      %c0_16 = arith.constant 0 : index
      %22 = vector.load %arg24[%c0_15, %c0_16] : memref<2x1xf32, #tpu.memory_space<vmem>>, vector<2x1xf32>
      %cst_17 = arith.constant 1.000000e+00 : f32
      %23 = vector.broadcast %cst_17 : f32 to vector<2x1xf32>
      %24 = arith.maximumf %22, %23 : vector<2x1xf32>
      %c0_18 = arith.constant 0 : index
      %c0_19 = arith.constant 0 : index
      %25 = vector.load %arg23[%c0_18, %c0_19] : memref<2x4xf32, #tpu.memory_space<vmem>>, vector<2x4xf32>
      %26 = vector.broadcast %24 : vector<2x1xf32> to vector<2x4xf32>
      %27 = arith.divf %25, %26 : vector<2x4xf32>
      %c0_20 = arith.constant 0 : index
      %c0_21 = arith.constant 0 : index
      %28 = vector.load %arg4[%c0_20, %c0_21] : memref<4x64xf32, #tpu.memory_space<vmem>>, vector<4x64xf32>
      %cst_22 = arith.constant dense<0.000000e+00> : vector<2x64xf32>
      %29 = tpu.matmul %27, %28, %cst_22 {dimension_numbers = #tpu.dot_dimension_numbers<[1], [0], [0], [1], [0, 0, 1, 1], [], []>} : vector<2x4xf32>, vector<4x64xf32>, vector<2x64xf32> -> vector<2x64xf32>
      %c0_23 = arith.constant 0 : index
      %c0_24 = arith.constant 0 : index
      %30 = vector.load %arg5[%c0_23, %c0_24] : memref<1x64xf32, #tpu.memory_space<vmem>>, vector<1x64xf32>
      %31 = vector.broadcast %30 : vector<1x64xf32> to vector<2x64xf32>
      %32 = arith.addf %29, %31 : vector<2x64xf32>
      %cst_25 = arith.constant 0.000000e+00 : f32
      %33 = vector.broadcast %cst_25 : f32 to vector<2x64xf32>
      %34 = arith.maximumf %32, %33 : vector<2x64xf32>
      %c0_26 = arith.constant 0 : index
      %c0_27 = arith.constant 0 : index
      %35 = vector.load %arg6[%c0_26, %c0_27] : memref<64x32xf32, #tpu.memory_space<vmem>>, vector<64x32xf32>
      %cst_28 = arith.constant dense<0.000000e+00> : vector<2x32xf32>
      %36 = tpu.matmul %34, %35, %cst_28 {dimension_numbers = #tpu.dot_dimension_numbers<[1], [0], [0], [1], [0, 0, 1, 1], [], []>} : vector<2x64xf32>, vector<64x32xf32>, vector<2x32xf32> -> vector<2x32xf32>
      %c0_29 = arith.constant 0 : index
      %c0_30 = arith.constant 0 : index
      %37 = vector.load %arg7[%c0_29, %c0_30] : memref<1x32xf32, #tpu.memory_space<vmem>>, vector<1x32xf32>
      %38 = vector.broadcast %37 : vector<1x32xf32> to vector<2x32xf32>
      %39 = arith.addf %36, %38 : vector<2x32xf32>
      %c0_31 = arith.constant 0 : index
      %c0_32 = arith.constant 0 : index
      %40 = vector.load %arg8[%c0_31, %c0_32] : memref<32x32xf32, #tpu.memory_space<vmem>>, vector<32x32xf32>
      %cst_33 = arith.constant dense<0.000000e+00> : vector<2x32xf32>
      %41 = tpu.matmul %39, %40, %cst_33 {dimension_numbers = #tpu.dot_dimension_numbers<[1], [0], [0], [1], [0, 0, 1, 1], [], []>} : vector<2x32xf32>, vector<32x32xf32>, vector<2x32xf32> -> vector<2x32xf32>
      %c0_34 = arith.constant 0 : index
      %c0_35 = arith.constant 0 : index
      %42 = vector.load %arg9[%c0_34, %c0_35] : memref<1x32xf32, #tpu.memory_space<vmem>>, vector<1x32xf32>
      %43 = vector.broadcast %42 : vector<1x32xf32> to vector<2x32xf32>
      %44 = arith.addf %41, %43 : vector<2x32xf32>
      %c0_36 = arith.constant 0 : index
      %c0_37 = arith.constant 0 : index
      %45 = vector.load %arg10[%c0_36, %c0_37] : memref<32x32xf32, #tpu.memory_space<vmem>>, vector<32x32xf32>
      %cst_38 = arith.constant dense<0.000000e+00> : vector<2x32xf32>
      %46 = tpu.matmul %39, %45, %cst_38 {dimension_numbers = #tpu.dot_dimension_numbers<[1], [0], [0], [1], [0, 0, 1, 1], [], []>} : vector<2x32xf32>, vector<32x32xf32>, vector<2x32xf32> -> vector<2x32xf32>
      %c0_39 = arith.constant 0 : index
      %c0_40 = arith.constant 0 : index
      %47 = vector.load %arg11[%c0_39, %c0_40] : memref<1x32xf32, #tpu.memory_space<vmem>>, vector<1x32xf32>
      %48 = vector.broadcast %47 : vector<1x32xf32> to vector<2x32xf32>
      %49 = arith.addf %46, %48 : vector<2x32xf32>
      %cst_41 = arith.constant 5.000000e-01 : f32
      %50 = vector.broadcast %cst_41 : f32 to vector<2x32xf32>
      %51 = arith.mulf %50, %49 : vector<2x32xf32>
      %52 = math.exp %51 : vector<2x32xf32>
      %c0_42 = arith.constant 0 : index
      %c0_43 = arith.constant 0 : index
      %53 = vector.load %arg3[%c0_42, %c0_43] : memref<2x32xf32, #tpu.memory_space<vmem>>, vector<2x32xf32>
      %54 = arith.mulf %52, %53 : vector<2x32xf32>
      %55 = arith.addf %44, %54 : vector<2x32xf32>
      %c0_44 = arith.constant 0 : index
      %c0_45 = arith.constant 0 : index
      %56 = vector.load %arg14[%c0_44, %c0_45] : memref<128x64xf32, #tpu.memory_space<vmem>>, vector<128x64xf32>
      %c0_46 = arith.constant 0 : index
      %c0_47 = arith.constant 0 : index
      %57 = vector.load %arg15[%c0_46, %c0_47] : memref<2x64xf32, #tpu.memory_space<vmem>>, vector<2x64xf32>
      %cst_48 = arith.constant 0.000000e+00 : f32
      %58 = vector.broadcast %cst_48 : f32 to vector<2x32xf32>
      %59 = arith.maximumf %55, %58 : vector<2x32xf32>
      %60 = math.absf %55 : vector<2x32xf32>
      %cst_49 = arith.constant 0.000000e+00 : f32
      %61 = vector.broadcast %cst_49 : f32 to vector<2x32xf32>
      %62 = arith.subf %61, %60 : vector<2x32xf32>
      %63 = math.exp %62 : vector<2x32xf32>
      %64 = math.log1p %63 : vector<2x32xf32>
      %65 = arith.addf %59, %64 : vector<2x32xf32>
      %c0_50 = arith.constant 0 : index
      %c0_51 = arith.constant 0 : index
      %66 = vector.load %arg12[%c0_50, %c0_51] : memref<32x64xf32, #tpu.memory_space<vmem>>, vector<32x64xf32>
      %cst_52 = arith.constant dense<0.000000e+00> : vector<2x64xf32>
      %67 = tpu.matmul %65, %66, %cst_52 {dimension_numbers = #tpu.dot_dimension_numbers<[1], [0], [0], [1], [0, 0, 1, 1], [], []>} : vector<2x32xf32>, vector<32x64xf32>, vector<2x64xf32> -> vector<2x64xf32>
      %c0_53 = arith.constant 0 : index
      %c0_54 = arith.constant 0 : index
      %68 = vector.load %arg13[%c0_53, %c0_54] : memref<1x64xf32, #tpu.memory_space<vmem>>, vector<1x64xf32>
      %69 = vector.broadcast %68 : vector<1x64xf32> to vector<2x64xf32>
      %70 = arith.addf %67, %69 : vector<2x64xf32>
      %cst_55 = arith.constant 0.000000e+00 : f32
      %71 = vector.broadcast %cst_55 : f32 to vector<2x64xf32>
      %72 = arith.maximumf %70, %71 : vector<2x64xf32>
      %73 = math.absf %70 : vector<2x64xf32>
      %cst_56 = arith.constant 0.000000e+00 : f32
      %74 = vector.broadcast %cst_56 : f32 to vector<2x64xf32>
      %75 = arith.subf %74, %73 : vector<2x64xf32>
      %76 = math.exp %75 : vector<2x64xf32>
      %77 = math.log1p %76 : vector<2x64xf32>
      %78 = arith.addf %72, %77 : vector<2x64xf32>
      %79 = vector.extract_strided_slice %56 {offsets = [0, 0], sizes = [64, 64], strides = [1, 1]} : vector<128x64xf32> to vector<64x64xf32>
      %cst_57 = arith.constant dense<0.000000e+00> : vector<2x64xf32>
      %80 = tpu.matmul %78, %79, %cst_57 {dimension_numbers = #tpu.dot_dimension_numbers<[1], [0], [0], [1], [0, 0, 1, 1], [], []>} : vector<2x64xf32>, vector<64x64xf32>, vector<2x64xf32> -> vector<2x64xf32>
      %81 = vector.extract_strided_slice %57 {offsets = [0, 0], sizes = [1, 64], strides = [1, 1]} : vector<2x64xf32> to vector<1x64xf32>
      %82 = vector.broadcast %81 : vector<1x64xf32> to vector<2x64xf32>
      %83 = arith.addf %80, %82 : vector<2x64xf32>
      %cst_58 = arith.constant 0.000000e+00 : f32
      %84 = vector.broadcast %cst_58 : f32 to vector<2x64xf32>
      %85 = arith.maximumf %83, %84 : vector<2x64xf32>
      %86 = math.absf %83 : vector<2x64xf32>
      %cst_59 = arith.constant 0.000000e+00 : f32
      %87 = vector.broadcast %cst_59 : f32 to vector<2x64xf32>
      %88 = arith.subf %87, %86 : vector<2x64xf32>
      %89 = math.exp %88 : vector<2x64xf32>
      %90 = math.log1p %89 : vector<2x64xf32>
      %91 = arith.addf %85, %90 : vector<2x64xf32>
      %92 = vector.extract_strided_slice %56 {offsets = [64, 0], sizes = [64, 64], strides = [1, 1]} : vector<128x64xf32> to vector<64x64xf32>
      %cst_60 = arith.constant dense<0.000000e+00> : vector<2x64xf32>
      %93 = tpu.matmul %91, %92, %cst_60 {dimension_numbers = #tpu.dot_dimension_numbers<[1], [0], [0], [1], [0, 0, 1, 1], [], []>} : vector<2x64xf32>, vector<64x64xf32>, vector<2x64xf32> -> vector<2x64xf32>
      %94 = vector.extract_strided_slice %57 {offsets = [1, 0], sizes = [1, 64], strides = [1, 1]} : vector<2x64xf32> to vector<1x64xf32>
      %95 = vector.broadcast %94 : vector<1x64xf32> to vector<2x64xf32>
      %96 = arith.addf %93, %95 : vector<2x64xf32>
      %cst_61 = arith.constant 0.000000e+00 : f32
      %97 = vector.broadcast %cst_61 : f32 to vector<2x64xf32>
      %98 = arith.maximumf %96, %97 : vector<2x64xf32>
      %99 = math.absf %96 : vector<2x64xf32>
      %cst_62 = arith.constant 0.000000e+00 : f32
      %100 = vector.broadcast %cst_62 : f32 to vector<2x64xf32>
      %101 = arith.subf %100, %99 : vector<2x64xf32>
      %102 = math.exp %101 : vector<2x64xf32>
      %103 = math.log1p %102 : vector<2x64xf32>
      %104 = arith.addf %98, %103 : vector<2x64xf32>
      %c0_63 = arith.constant 0 : index
      %c0_64 = arith.constant 0 : index
      %105 = vector.load %arg16[%c0_63, %c0_64] : memref<64x1xf32, #tpu.memory_space<vmem>>, vector<64x1xf32>
      %cst_65 = arith.constant dense<0.000000e+00> : vector<2x1xf32>
      %106 = tpu.matmul %104, %105, %cst_65 {dimension_numbers = #tpu.dot_dimension_numbers<[1], [0], [0], [1], [0, 0, 1, 1], [], []>} : vector<2x64xf32>, vector<64x1xf32>, vector<2x1xf32> -> vector<2x1xf32>
      %c0_66 = arith.constant 0 : index
      %c0_67 = arith.constant 0 : index
      %107 = vector.load %arg17[%c0_66, %c0_67] : memref<1x1xf32, #tpu.memory_space<vmem>>, vector<1x1xf32>
      %108 = vector.broadcast %107 : vector<1x1xf32> to vector<2x1xf32>
      %109 = arith.addf %106, %108 : vector<2x1xf32>
      %c0_68 = arith.constant 0 : index
      %c0_69 = arith.constant 0 : index
      %110 = vector.load %arg19[%c0_68, %c0_69] : memref<2x32xf32, #tpu.memory_space<vmem>>, vector<2x32xf32>
      tpu.vector_store %arg19[%c0_68, %c0_69], %44 {strides = array<i32>} : memref<2x32xf32, #tpu.memory_space<vmem>>, vector<2x32xf32>,
      %c0_70 = arith.constant 0 : index
      %c0_71 = arith.constant 0 : index
      %111 = vector.load %arg20[%c0_70, %c0_71] : memref<2x32xf32, #tpu.memory_space<vmem>>, vector<2x32xf32>
      tpu.vector_store %arg20[%c0_70, %c0_71], %49 {strides = array<i32>} : memref<2x32xf32, #tpu.memory_space<vmem>>, vector<2x32xf32>,
      %c0_72 = arith.constant 0 : index
      %c0_73 = arith.constant 0 : index
      %112 = vector.load %arg21[%c0_72, %c0_73] : memref<2x1xf32, #tpu.memory_space<vmem>>, vector<2x1xf32>
      tpu.vector_store %arg21[%c0_72, %c0_73], %109 {strides = array<i32>} : memref<2x1xf32, #tpu.memory_space<vmem>>, vector<2x1xf32>,
      %c0_74 = arith.constant 0 : index
      %c0_75 = arith.constant 0 : index
      %113 = vector.load %arg18[%c0_74, %c0_75] : memref<32x128xf32, #tpu.memory_space<vmem>>, vector<32x128xf32>
      %cst_76 = arith.constant dense<0.000000e+00> : vector<2x128xf32>
      %114 = tpu.matmul %44, %113, %cst_76 {dimension_numbers = #tpu.dot_dimension_numbers<[1], [0], [0], [1], [0, 0, 1, 1], [], []>} : vector<2x32xf32>, vector<32x128xf32>, vector<2x128xf32> -> vector<2x128xf32>
      %c0_77 = arith.constant 0 : index
      %c0_78 = arith.constant 0 : index
      %115 = vector.load %arg22[%c0_77, %c0_78] : memref<2x128xf32, #tpu.memory_space<vmem>>, vector<2x128xf32>
      tpu.vector_store %arg22[%c0_77, %c0_78], %114 {strides = array<i32>} : memref<2x128xf32, #tpu.memory_space<vmem>>, vector<2x128xf32>,
    } else {
    }
    return
  }
  func.func @transform_0(%arg0: i32) -> (i32, i32) {
    %c0_i32 = arith.constant 0 : i32
    %c0_i32_0 = arith.constant 0 : i32
    return %arg0, %c0_i32 : i32, i32
  }
  func.func @transform_1(%arg0: i32) -> (i32, i32) {
    %c0_i32 = arith.constant 0 : i32
    %c0_i32_0 = arith.constant 0 : i32
    return %c0_i32, %arg0 : i32, i32
  }
  func.func @transform_2(%arg0: i32) -> (i32, i32) {
    %c0_i32 = arith.constant 0 : i32
    %c0_i32_0 = arith.constant 0 : i32
    %c0_i32_1 = arith.constant 0 : i32
    return %c0_i32, %c0_i32_0 : i32, i32
  }
  func.func @transform_3(%arg0: i32) -> (i32, i32) {
    %c0_i32 = arith.constant 0 : i32
    %c0_i32_0 = arith.constant 0 : i32
    %c0_i32_1 = arith.constant 0 : i32
    return %c0_i32, %c0_i32_0 : i32, i32
  }
  func.func @transform_4(%arg0: i32) -> (i32, i32) {
    %c0_i32 = arith.constant 0 : i32
    %c0_i32_0 = arith.constant 0 : i32
    %c0_i32_1 = arith.constant 0 : i32
    return %c0_i32, %c0_i32_0 : i32, i32
  }
  func.func @transform_5(%arg0: i32) -> (i32, i32) {
    %c0_i32 = arith.constant 0 : i32
    %c0_i32_0 = arith.constant 0 : i32
    %c0_i32_1 = arith.constant 0 : i32
    return %c0_i32, %c0_i32_0 : i32, i32
  }
  func.func @transform_6(%arg0: i32) -> (i32, i32) {
    %c0_i32 = arith.constant 0 : i32
    %c0_i32_0 = arith.constant 0 : i32
    %c0_i32_1 = arith.constant 0 : i32
    return %c0_i32, %c0_i32_0 : i32, i32
  }
  func.func @transform_7(%arg0: i32) -> (i32, i32) {
    %c0_i32 = arith.constant 0 : i32
    %c0_i32_0 = arith.constant 0 : i32
    %c0_i32_1 = arith.constant 0 : i32
    return %c0_i32, %c0_i32_0 : i32, i32
  }
  func.func @transform_8(%arg0: i32) -> (i32, i32) {
    %c0_i32 = arith.constant 0 : i32
    %c0_i32_0 = arith.constant 0 : i32
    %c0_i32_1 = arith.constant 0 : i32
    return %c0_i32, %c0_i32_0 : i32, i32
  }
  func.func @transform_9(%arg0: i32) -> (i32, i32) {
    %c0_i32 = arith.constant 0 : i32
    %c0_i32_0 = arith.constant 0 : i32
    %c0_i32_1 = arith.constant 0 : i32
    return %c0_i32, %c0_i32_0 : i32, i32
  }
  func.func @transform_10(%arg0: i32) -> (i32, i32) {
    %c0_i32 = arith.constant 0 : i32
    %c0_i32_0 = arith.constant 0 : i32
    %c0_i32_1 = arith.constant 0 : i32
    return %c0_i32, %c0_i32_0 : i32, i32
  }
  func.func @transform_11(%arg0: i32) -> (i32, i32) {
    %c0_i32 = arith.constant 0 : i32
    %c0_i32_0 = arith.constant 0 : i32
    %c0_i32_1 = arith.constant 0 : i32
    return %c0_i32, %c0_i32_0 : i32, i32
  }
  func.func @transform_12(%arg0: i32) -> (i32, i32) {
    %c0_i32 = arith.constant 0 : i32
    %c0_i32_0 = arith.constant 0 : i32
    %c0_i32_1 = arith.constant 0 : i32
    return %c0_i32, %c0_i32_0 : i32, i32
  }
  func.func @transform_13(%arg0: i32) -> (i32, i32) {
    %c0_i32 = arith.constant 0 : i32
    %c0_i32_0 = arith.constant 0 : i32
    %c0_i32_1 = arith.constant 0 : i32
    return %c0_i32, %c0_i32_0 : i32, i32
  }
  func.func @transform_14(%arg0: i32) -> (i32, i32) {
    %c0_i32 = arith.constant 0 : i32
    %c0_i32_0 = arith.constant 0 : i32
    %c0_i32_1 = arith.constant 0 : i32
    return %c0_i32, %c0_i32_0 : i32, i32
  }
  func.func @transform_15(%arg0: i32) -> (i32, i32) {
    %c0_i32 = arith.constant 0 : i32
    %c0_i32_0 = arith.constant 0 : i32
    %c0_i32_1 = arith.constant 0 : i32
    return %c0_i32, %c0_i32_0 : i32, i32
  }
  func.func @transform_16(%arg0: i32) -> (i32, i32) {
    %c0_i32 = arith.constant 0 : i32
    %c0_i32_0 = arith.constant 0 : i32
    %c0_i32_1 = arith.constant 0 : i32
    return %c0_i32, %c0_i32_0 : i32, i32
  }
  func.func @transform_17(%arg0: i32) -> (i32, i32) {
    %c0_i32 = arith.constant 0 : i32
    %c0_i32_0 = arith.constant 0 : i32
    %c0_i32_1 = arith.constant 0 : i32
    return %c0_i32, %c0_i32_0 : i32, i32
  }
  func.func @transform_18(%arg0: i32) -> (i32, i32) {
    %c0_i32 = arith.constant 0 : i32
    %c0_i32_0 = arith.constant 0 : i32
    %c0_i32_1 = arith.constant 0 : i32
    return %c0_i32, %c0_i32_0 : i32, i32
  }
  func.func @transform_19(%arg0: i32) -> (i32, i32) {
    %c0_i32 = arith.constant 0 : i32
    %c0_i32_0 = arith.constant 0 : i32
    %c0_i32_1 = arith.constant 0 : i32
    return %c0_i32, %c0_i32_0 : i32, i32
  }
  func.func @transform_20(%arg0: i32) -> (i32, i32) {
    %c0_i32 = arith.constant 0 : i32
    %c0_i32_0 = arith.constant 0 : i32
    %c0_i32_1 = arith.constant 0 : i32
    return %c0_i32, %c0_i32_0 : i32, i32
  }
  func.func @transform_21(%arg0: i32) -> (i32, i32) {
    %c0_i32 = arith.constant 0 : i32
    %c0_i32_0 = arith.constant 0 : i32
    %c0_i32_1 = arith.constant 0 : i32
    return %c0_i32, %c0_i32_0 : i32, i32
  }
}

module attributes {stable_mosaic.version = 11 : i64} {
  func.func @decoder_kernel(%arg0: i32, %arg1: memref<32x11xf32, #tpu.memory_space<vmem>>, %arg2: memref<2x128xf32, #tpu.memory_space<vmem>>, %arg3: memref<10x128xbf16, #tpu.memory_space<vmem>>, %arg4: memref<1x128xf32, #tpu.memory_space<vmem>>, %arg5: memref<128x128xbf16, #tpu.memory_space<vmem>>, %arg6: memref<1x128xf32, #tpu.memory_space<vmem>>, %arg7: memref<128x3xbf16, #tpu.memory_space<vmem>>, %arg8: memref<1x3xf32, #tpu.memory_space<vmem>>, %arg9: memref<32x3xf32, #tpu.memory_space<vmem>>) attributes {dimension_semantics = [#tpu.dimension_semantics<parallel>], iteration_bounds = array<i64: 1>, scalar_prefetch = 0 : i64, scratch_operands = 0 : i64, tpu.core_type = #tpu.core_type<tc>, window_params = [{transform_indices = @transform_0, window_bounds = array<i64: 32, 11>}, {pipeline_mode = #tpu.pipeline_mode<synchronous>, transform_indices = @transform_1, window_bounds = array<i64: 2, 128>}, {pipeline_mode = #tpu.pipeline_mode<synchronous>, transform_indices = @transform_2, window_bounds = array<i64: 10, 128>}, {pipeline_mode = #tpu.pipeline_mode<synchronous>, transform_indices = @transform_3, window_bounds = array<i64: 1, 128>}, {pipeline_mode = #tpu.pipeline_mode<synchronous>, transform_indices = @transform_4, window_bounds = array<i64: 128, 128>}, {pipeline_mode = #tpu.pipeline_mode<synchronous>, transform_indices = @transform_5, window_bounds = array<i64: 1, 128>}, {pipeline_mode = #tpu.pipeline_mode<synchronous>, transform_indices = @transform_6, window_bounds = array<i64: 128, 3>}, {pipeline_mode = #tpu.pipeline_mode<synchronous>, transform_indices = @transform_7, window_bounds = array<i64: 1, 3>}, {transform_indices = @transform_8, window_bounds = array<i64: 32, 3>}]} {
    %c0 = arith.constant 0 : index
    %c0_0 = arith.constant 0 : index
    %0 = vector.load %arg1[%c0, %c0_0] : memref<32x11xf32, #tpu.memory_space<vmem>>, vector<32x11xf32>
    %1 = vector.extract_strided_slice %0 {offsets = [0, 0], sizes = [32, 10], strides = [1, 1]} : vector<32x11xf32> to vector<32x10xf32>
    %2 = vector.extract_strided_slice %0 {offsets = [0, 10], sizes = [32, 1], strides = [1, 1]} : vector<32x11xf32> to vector<32x1xf32>
    %3 = arith.fptosi %2 : vector<32x1xf32> to vector<32x1xi32>
    %4 = tpu.iota {dimensions = array<i32: 1>} : vector<32x2xi32>
    %5 = vector.broadcast %3 : vector<32x1xi32> to vector<32x2xi32>
    %6 = arith.cmpi eq, %4, %5 : vector<32x2xi32>
    %7 = arith.extui %6 : vector<32x2xi1> to vector<32x2xi32>
    %8 = arith.sitofp %7 : vector<32x2xi32> to vector<32x2xf32>
    %c0_1 = arith.constant 0 : index
    %c0_2 = arith.constant 0 : index
    %9 = vector.load %arg2[%c0_1, %c0_2] : memref<2x128xf32, #tpu.memory_space<vmem>>, vector<2x128xf32>
    %cst = arith.constant dense<0.000000e+00> : vector<32x128xf32>
    %10 = tpu.matmul %8, %9, %cst {dimension_numbers = #tpu.dot_dimension_numbers<[1], [0], [0], [1], [0, 0, 1, 1], [], []>} : vector<32x2xf32>, vector<2x128xf32>, vector<32x128xf32> -> vector<32x128xf32>
    %11 = arith.truncf %1 : vector<32x10xf32> to vector<32x10xbf16>
    %c0_3 = arith.constant 0 : index
    %c0_4 = arith.constant 0 : index
    %12 = vector.load %arg3[%c0_3, %c0_4] : memref<10x128xbf16, #tpu.memory_space<vmem>>, vector<10x128xbf16>
    %cst_5 = arith.constant dense<0.000000e+00> : vector<32x128xf32>
    %13 = tpu.matmul %11, %12, %cst_5 {dimension_numbers = #tpu.dot_dimension_numbers<[1], [0], [0], [1], [0, 0, 1, 1], [], []>} : vector<32x10xbf16>, vector<10x128xbf16>, vector<32x128xf32> -> vector<32x128xf32>
    %14 = arith.addf %13, %10 : vector<32x128xf32>
    %c0_6 = arith.constant 0 : index
    %c0_7 = arith.constant 0 : index
    %15 = vector.load %arg4[%c0_6, %c0_7] : memref<1x128xf32, #tpu.memory_space<vmem>>, vector<1x128xf32>
    %16 = vector.broadcast %15 : vector<1x128xf32> to vector<32x128xf32>
    %17 = arith.addf %14, %16 : vector<32x128xf32>
    %cst_8 = arith.constant 0.000000e+00 : f32
    %18 = vector.broadcast %cst_8 : f32 to vector<32x128xf32>
    %19 = arith.maximumf %17, %18 : vector<32x128xf32>
    %20 = arith.truncf %19 : vector<32x128xf32> to vector<32x128xbf16>
    %c0_9 = arith.constant 0 : index
    %c0_10 = arith.constant 0 : index
    %21 = vector.load %arg5[%c0_9, %c0_10] : memref<128x128xbf16, #tpu.memory_space<vmem>>, vector<128x128xbf16>
    %cst_11 = arith.constant dense<0.000000e+00> : vector<32x128xf32>
    %22 = tpu.matmul %20, %21, %cst_11 {dimension_numbers = #tpu.dot_dimension_numbers<[1], [0], [0], [1], [0, 0, 1, 1], [], []>} : vector<32x128xbf16>, vector<128x128xbf16>, vector<32x128xf32> -> vector<32x128xf32>
    %c0_12 = arith.constant 0 : index
    %c0_13 = arith.constant 0 : index
    %23 = vector.load %arg6[%c0_12, %c0_13] : memref<1x128xf32, #tpu.memory_space<vmem>>, vector<1x128xf32>
    %24 = vector.broadcast %23 : vector<1x128xf32> to vector<32x128xf32>
    %25 = arith.addf %22, %24 : vector<32x128xf32>
    %cst_14 = arith.constant 0.000000e+00 : f32
    %26 = vector.broadcast %cst_14 : f32 to vector<32x128xf32>
    %27 = arith.maximumf %25, %26 : vector<32x128xf32>
    %28 = arith.truncf %27 : vector<32x128xf32> to vector<32x128xbf16>
    %c0_15 = arith.constant 0 : index
    %c0_16 = arith.constant 0 : index
    %29 = vector.load %arg7[%c0_15, %c0_16] : memref<128x3xbf16, #tpu.memory_space<vmem>>, vector<128x3xbf16>
    %cst_17 = arith.constant dense<0.000000e+00> : vector<32x3xf32>
    %30 = tpu.matmul %28, %29, %cst_17 {dimension_numbers = #tpu.dot_dimension_numbers<[1], [0], [0], [1], [0, 0, 1, 1], [], []>} : vector<32x128xbf16>, vector<128x3xbf16>, vector<32x3xf32> -> vector<32x3xf32>
    %c0_18 = arith.constant 0 : index
    %c0_19 = arith.constant 0 : index
    %31 = vector.load %arg8[%c0_18, %c0_19] : memref<1x3xf32, #tpu.memory_space<vmem>>, vector<1x3xf32>
    %32 = vector.broadcast %31 : vector<1x3xf32> to vector<32x3xf32>
    %33 = arith.addf %30, %32 : vector<32x3xf32>
    %c0_20 = arith.constant 0 : index
    %c0_21 = arith.constant 0 : index
    %34 = vector.load %arg9[%c0_20, %c0_21] : memref<32x3xf32, #tpu.memory_space<vmem>>, vector<32x3xf32>
    tpu.vector_store %arg9[%c0_20, %c0_21], %33 {strides = array<i32>} : memref<32x3xf32, #tpu.memory_space<vmem>>, vector<32x3xf32>,
    return
  }
  func.func @transform_0(%arg0: i32) -> (i32, i32) {
    %c0_i32 = arith.constant 0 : i32
    %c0_i32_0 = arith.constant 0 : i32
    return %arg0, %c0_i32 : i32, i32
  }
  func.func @transform_1(%arg0: i32) -> (i32, i32) {
    %c0_i32 = arith.constant 0 : i32
    %c0_i32_0 = arith.constant 0 : i32
    %c0_i32_1 = arith.constant 0 : i32
    return %c0_i32, %c0_i32_0 : i32, i32
  }
  func.func @transform_2(%arg0: i32) -> (i32, i32) {
    %c0_i32 = arith.constant 0 : i32
    %c0_i32_0 = arith.constant 0 : i32
    %c0_i32_1 = arith.constant 0 : i32
    return %c0_i32, %c0_i32_0 : i32, i32
  }
  func.func @transform_3(%arg0: i32) -> (i32, i32) {
    %c0_i32 = arith.constant 0 : i32
    %c0_i32_0 = arith.constant 0 : i32
    %c0_i32_1 = arith.constant 0 : i32
    return %c0_i32, %c0_i32_0 : i32, i32
  }
  func.func @transform_4(%arg0: i32) -> (i32, i32) {
    %c0_i32 = arith.constant 0 : i32
    %c0_i32_0 = arith.constant 0 : i32
    %c0_i32_1 = arith.constant 0 : i32
    return %c0_i32, %c0_i32_0 : i32, i32
  }
  func.func @transform_5(%arg0: i32) -> (i32, i32) {
    %c0_i32 = arith.constant 0 : i32
    %c0_i32_0 = arith.constant 0 : i32
    %c0_i32_1 = arith.constant 0 : i32
    return %c0_i32, %c0_i32_0 : i32, i32
  }
  func.func @transform_6(%arg0: i32) -> (i32, i32) {
    %c0_i32 = arith.constant 0 : i32
    %c0_i32_0 = arith.constant 0 : i32
    %c0_i32_1 = arith.constant 0 : i32
    return %c0_i32, %c0_i32_0 : i32, i32
  }
  func.func @transform_7(%arg0: i32) -> (i32, i32) {
    %c0_i32 = arith.constant 0 : i32
    %c0_i32_0 = arith.constant 0 : i32
    %c0_i32_1 = arith.constant 0 : i32
    return %c0_i32, %c0_i32_0 : i32, i32
  }
  func.func @transform_8(%arg0: i32) -> (i32, i32) {
    %c0_i32 = arith.constant 0 : i32
    %c0_i32_0 = arith.constant 0 : i32
    return %arg0, %c0_i32 : i32, i32
  }
}

</mosaic_0001>

<llo_original>
// kernel: _vae_forward_one.3
$region0: #{_vae_forward_one.3}
  #allocation0 [shape = 'u32[]', space=smem, size = 0x4, offset = 0x4, fixed_abs, tag = 'smem constant byte address 0x4 - core index']
  #allocation1 [shape = 'u32[144,128]{1,0:T(1,128)}', space=vmem, size = 0x12000, scoped, tag = 'internal scratch']
  %s0 = inlined_call_operand.vmem [shape: f32[32,11], index: 0, kind: input, shape index: {}]
  %s1 = inlined_call_operand.vmem [shape: f32[2,128], index: 1, kind: input, shape index: {}]
  %s2 = inlined_call_operand.vmem [shape: bf16[10,128], index: 2, kind: input, shape index: {}]
  %s3 = inlined_call_operand.vmem [shape: f32[1,128], index: 3, kind: input, shape index: {}]
  %s4 = inlined_call_operand.vmem [shape: bf16[128,128], index: 4, kind: input, shape index: {}]
  %s5 = inlined_call_operand.vmem [shape: f32[1,128], index: 5, kind: input, shape index: {}]
  %s6 = inlined_call_operand.vmem [shape: bf16[128,3], index: 6, kind: input, shape index: {}]
  %s7 = inlined_call_operand.vmem [shape: f32[1,3], index: 7, kind: input, shape index: {}]
  %s8 = inlined_call_operand.vmem [shape: f32[32,3], index: 8, kind: output, shape index: {}]
  %s9 = sld [smem:[#allocation0]]
  $region42: #{_vae_forward_one.3} parent=0
    _
  %s11 = ssub.s32 1, %s9
  %s12 = scalar_select 0, %s11, %s9
  // Predicated region
  $region2: #{_vae_forward_one.3} parent=0 // pred_check
    _
  $region3: #{_vae_forward_one.3} parent=0 // pred_check_branch
    %14 = sbr.rel (0) target = $region5
  $region4: #{_vae_forward_one.3} parent=0 // pred_region
    _
  $region5: #{_vae_forward_one.3} parent=0 // pred_fallthru
    _
  // Predicated region
  $region6: #{_vae_forward_one.3} parent=0 // pred_check
    _
  $region7: #{_vae_forward_one.3} parent=0 // pred_check_branch
    %16 = sbr.rel (0) target = $region9
  $region8: #{_vae_forward_one.3} parent=0 // pred_region
    _
  $region9: #{_vae_forward_one.3} parent=0 // pred_fallthru
    _
  // Predicated region
  $region10: #{_vae_forward_one.3} parent=0 // pred_check
    _
  $region11: #{_vae_forward_one.3} parent=0 // pred_check_branch
    %18 = sbr.rel (0) target = $region13
  $region12: #{_vae_forward_one.3} parent=0 // pred_region
    _
  $region13: #{_vae_forward_one.3} parent=0 // pred_fallthru
    _
  // Predicated region
  $region14: #{_vae_forward_one.3} parent=0 // pred_check
    _
  $region15: #{_vae_forward_one.3} parent=0 // pred_check_branch
    %20 = sbr.rel (0) target = $region17
  $region16: #{_vae_forward_one.3} parent=0 // pred_region
    _
  $region17: #{_vae_forward_one.3} parent=0 // pred_fallthru
    _
  // Predicated region
  $region18: #{_vae_forward_one.3} parent=0 // pred_check
    _
  $region19: #{_vae_forward_one.3} parent=0 // pred_check_branch
    %22 = sbr.rel (0) target = $region21
  $region20: #{_vae_forward_one.3} parent=0 // pred_region
    _
  $region21: #{_vae_forward_one.3} parent=0 // pred_fallthru
    _
  // Predicated region
  $region22: #{_vae_forward_one.3} parent=0 // pred_check
    _
  $region23: #{_vae_forward_one.3} parent=0 // pred_check_branch
    %24 = sbr.rel (0) target = $region25
  $region24: #{_vae_forward_one.3} parent=0 // pred_region
    _
  $region25: #{_vae_forward_one.3} parent=0 // pred_fallthru
    _
  // Predicated region
  $region26: #{_vae_forward_one.3} parent=0 // pred_check
    _
  $region27: #{_vae_forward_one.3} parent=0 // pred_check_branch
    %26 = sbr.rel (0) target = $region29
  $region28: #{_vae_forward_one.3} parent=0 // pred_region
    _
  $region29: #{_vae_forward_one.3} parent=0 // pred_fallthru
    _
  // Predicated region
  $region30: #{_vae_forward_one.3} parent=0 // pred_check
    _
  $region31: #{_vae_forward_one.3} parent=0 // pred_check_branch
    %28 = sbr.rel (0) target = $region33
  $region32: #{_vae_forward_one.3} parent=0 // pred_region
    _
  $region33: #{_vae_forward_one.3} parent=0 // pred_fallthru
    _
  %v30 = vld [vmem:[%s0] sm:$0xff]
  %v31 = vld [vmem:[%s0 + $0x8] sm:$0xff]
  %v32 = vld [vmem:[%s0 + $0x10] sm:$0xff]
  %v33 = vld [vmem:[%s0 + $0x18] sm:$0xff]
  %v34 = vcvt.f32.s32.to.zero.pseudo %v30
  %v35 = vcvt.f32.s32.to.zero.pseudo %v31
  %v36 = vcvt.f32.s32.to.zero.pseudo %v32
  %v37 = vcvt.f32.s32.to.zero.pseudo %v33
  %v38 = vlaneseq
  %v39 = vand.u32 %v38, 127
  %40 = vset.pattern.permute.xlu0 10
  %41 = vperm.xlu0 %40, %v34
  %v42 = vpop.permute.xlu0 %41
  %43 = vset.pattern.permute.xlu0 10
  %44 = vperm.xlu0 %43, %v35
  %v45 = vpop.permute.xlu0 %44
  %46 = vset.pattern.permute.xlu0 10
  %47 = vperm.xlu0 %46, %v36
  %v48 = vpop.permute.xlu0 %47
  %49 = vset.pattern.permute.xlu0 10
  %50 = vperm.xlu0 %49, %v37
  %v51 = vpop.permute.xlu0 %50
  %vm52 = vcmp.eq.s32.totalorder %v39, %v42
  %vm53 = vcmp.eq.s32.totalorder %v39, %v45
  %vm54 = vcmp.eq.s32.totalorder %v39, %v48
  %vm55 = vcmp.eq.s32.totalorder %v39, %v51
  %v56 = vsel %vm52, 1, 0
  %v57 = vsel %vm53, 1, 0
  %v58 = vsel %vm54, 1, 0
  %v59 = vsel %vm55, 1, 0
  %v60 = vcvt.s32.f32 %v56
  %v61 = vcvt.s32.f32 %v57
  %v62 = vcvt.s32.f32 %v58
  %v63 = vcvt.s32.f32 %v59
  %v64 = vld [vmem:[%s1] sm:$0x3]
  %vm65 = vcmask 15360
  %v67 = vsel %vm65, %v60, 0
  %v70 = vsel %vm65, %v61, 0
  %v73 = vsel %vm65, %v62, 0
  %v76 = vsel %vm65, %v63, 0
  %vm78 = vcmask 1041408
  %v80 = vsel %vm78, %v64, 0
  %82 = vmatprep.subr.mxu0 0.0
  %83 = vmatpush1.msra.mxu0 0.0
  %84 = vmatprep.subr.mxu0 0.0
  %85 = vmatpush1.msra.mxu0 0.0
  %86 = vmatprep.subr.mxu0 0.0
  %87 = vmatpush1.msra.mxu0 0.0
  %88 = vmatprep.subr.mxu0 0.0
  %89 = vmatpush1.msra.mxu0 0.0
  %90 = vmatprep.subr.mxu0 0.0
  %91 = vmatpush1.msra.mxu0 0.0
  %92 = vmatprep.subr.mxu0 0.0
  %93 = vmatpush1.msra.mxu0 0.0
  %94 = vmatprep.subr.mxu0 0.0
  %95 = vmatpush1.msra.mxu0 0.0
  %96 = vmatprep.subr.mxu0 0.0
  %97 = vmatpush1.msra.mxu0 0.0
  %98 = vmatprep.subr.mxu0 0.0
  %99 = vmatpush1.msra.mxu0 0.0
  %100 = vmatprep.subr.mxu0 0.0
  %101 = vmatpush1.msra.mxu0 0.0
  %102 = vmatprep.subr.mxu0 0.0
  %103 = vmatpush1.msra.mxu0 0.0
  %104 = vmatprep.subr.mxu0 0.0
  %105 = vmatpush1.msra.mxu0 0.0
  %106 = vmatprep.subr.mxu0 0.0
  %107 = vmatpush1.msra.mxu0 0.0
  %108 = vmatprep.subr.mxu0 0.0
  %109 = vmatpush1.msra.mxu0 0.0
  %110 = vmatprep.subr.mxu0 0.0
  %111 = vmatpush1.msra.mxu0 0.0
  %112 = vmatprep.subr.mxu0 0.0
  %113 = vmatpush1.msra.mxu0 %v80
  %114 = vmatprep.subr.mxu0 0.0
  %115 = vmatpush2.msra.mxu0 0.0
  %116 = vmatprep.subr.mxu0 0.0
  %117 = vmatpush2.msra.mxu0 0.0
  %118 = vmatprep.subr.mxu0 0.0
  %119 = vmatpush2.msra.mxu0 0.0
  %120 = vmatprep.subr.mxu0 0.0
  %121 = vmatpush2.msra.mxu0 0.0
  %122 = vmatprep.subr.mxu0 0.0
  %123 = vmatpush2.msra.mxu0 0.0
  %124 = vmatprep.subr.mxu0 0.0
  %125 = vmatpush2.msra.mxu0 0.0
  %126 = vmatprep.subr.mxu0 0.0
  %127 = vmatpush2.msra.mxu0 0.0
  %128 = vmatprep.subr.mxu0 0.0
  %129 = vmatpush2.msra.mxu0 0.0
  %130 = vmatprep.subr.mxu0 0.0
  %131 = vmatpush2.msra.mxu0 0.0
  %132 = vmatprep.subr.mxu0 0.0
  %133 = vmatpush2.msra.mxu0 0.0
  %134 = vmatprep.subr.mxu0 0.0
  %135 = vmatpush2.msra.mxu0 0.0
  %136 = vmatprep.subr.mxu0 0.0
  %137 = vmatpush2.msra.mxu0 0.0
  %138 = vmatprep.subr.mxu0 0.0
  %139 = vmatpush2.msra.mxu0 0.0
  %140 = vmatprep.subr.mxu0 0.0
  %141 = vmatpush2.msra.mxu0 0.0
  %142 = vmatprep.subr.mxu0 0.0
  %143 = vmatpush2.msra.mxu0 0.0
  %144 = vmatprep.subr.mxu0 0.0
  %145 = vmatpush2.msra.mxu0 0.0
  %146 = vmatprep.mubr.f32.mxu0 0.0
  %147 = vmatmul.mubr.f32.gmra.mxu0 %v67
  %v148 = vpop.f32.mrf.mxu0
  %v149 = vadd.f32 0.0, %v148
  %v150 = vpop.f32.mrf.mxu0
  %151 = vmatprep.mubr.f32.mxu0 0.0
  %152 = vmatmul.mubr.f32.gmra.mxu0 %v70
  %v153 = vpop.f32.mrf.mxu0
  %v154 = vadd.f32 0.0, %v153
  %v155 = vpop.f32.mrf.mxu0
  %156 = vmatprep.mubr.f32.mxu0 0.0
  %157 = vmatmul.mubr.f32.gmra.mxu0 %v73
  %v158 = vpop.f32.mrf.mxu0
  %v159 = vadd.f32 0.0, %v158
  %v160 = vpop.f32.mrf.mxu0
  %161 = vmatprep.mubr.f32.mxu0 0.0
  %162 = vmatmul.mubr.f32.gmra.mxu0 %v76
  %v163 = vpop.f32.mrf.mxu0
  %v164 = vadd.f32 0.0, %v163
  %v165 = vpop.f32.mrf.mxu0
  %166 = vdwg.mxu0
  %v167 = vpack.c.bf16 %v31, %v30
  %v168 = vpack.c.bf16 %v33, %v32
  %v169 = vld [vmem:[%s2] sm:$0xf]
  %v170 = vld [vmem:[%s2 + $0x4] sm:$0x1]
  %v173 = vunpack.c.l.b16 %v169
  %v174 = vunpack.c.l.b16 %v170
  %v175 = vpack.c.b16 %v174, %v173
  %vm176 = vcmask 80896
  %v178 = vsel %vm176, %v167, 0
  %v181 = vsel %vm176, %v168, 0
  %vm183 = vcmask 1044480
  %v185 = vsel %vm183, %v175, 0
  %187 = vmatprep.subr.bf16.mxu0 0
  %188 = vmatpush1.bf16.msra.mxu0 0
  %189 = vmatprep.subr.bf16.mxu0 0
  %190 = vmatpush1.bf16.msra.mxu0 0
  %191 = vmatprep.subr.bf16.mxu0 0
  %192 = vmatpush1.bf16.msra.mxu0 0
  %193 = vmatprep.subr.bf16.mxu0 0
  %194 = vmatpush1.bf16.msra.mxu0 0
  %195 = vmatprep.subr.bf16.mxu0 0
  %196 = vmatpush1.bf16.msra.mxu0 0
  %197 = vmatprep.subr.bf16.mxu0 0
  %198 = vmatpush1.bf16.msra.mxu0 0
  %199 = vmatprep.subr.bf16.mxu0 0
  %200 = vmatpush1.bf16.msra.mxu0 0
  %201 = vmatprep.subr.bf16.mxu0 0
  %202 = vmatpush1.bf16.msra.mxu0 %v185
  %203 = vmatprep.subr.bf16.mxu0 0
  %204 = vmatpush2.bf16.msra.mxu0 0
  %205 = vmatprep.subr.bf16.mxu0 0
  %206 = vmatpush2.bf16.msra.mxu0 0
  %207 = vmatprep.subr.bf16.mxu0 0
  %208 = vmatpush2.bf16.msra.mxu0 0
  %209 = vmatprep.subr.bf16.mxu0 0
  %210 = vmatpush2.bf16.msra.mxu0 0
  %211 = vmatprep.subr.bf16.mxu0 0
  %212 = vmatpush2.bf16.msra.mxu0 0
  %213 = vmatprep.subr.bf16.mxu0 0
  %214 = vmatpush2.bf16.msra.mxu0 0
  %215 = vmatprep.subr.bf16.mxu0 0
  %216 = vmatpush2.bf16.msra.mxu0 0
  %217 = vmatprep.subr.bf16.mxu0 0
  %218 = vmatpush2.bf16.msra.mxu0 0
  %219 = vmatprep.mubr.bf16.mxu0 0
  %220 = vmatmul.mubr.bf16.gmra.mxu0 %v178
  %v221 = vpop.f32.mrf.mxu0
  %v222 = vadd.f32 %v149, %v221
  %v223 = vpop.f32.mrf.mxu0
  %v224 = vpop.f32.mrf.mxu0
  %v225 = vadd.f32 %v154, %v224
  %v226 = vpop.f32.mrf.mxu0
  %227 = vmatprep.mubr.bf16.mxu0 0
  %228 = vmatmul.mubr.bf16.gmra.mxu0 %v181
  %v229 = vpop.f32.mrf.mxu0
  %v230 = vadd.f32 %v159, %v229
  %v231 = vpop.f32.mrf.mxu0
  %v232 = vpop.f32.mrf.mxu0
  %v233 = vadd.f32 %v164, %v232
  %v234 = vpop.f32.mrf.mxu0
  %235 = vdwg.mxu0
  %v236 = vld [vmem:[%s3] sm:$0x1]
  %v238 = vlaneseq
  %v239 = vshrl.u32 %v238, 7
  %v240 = vsub.s32 0, %v239
  %v241 = vrot.slane %v236, %v240
  %v243 = vadd.f32 %v222, %v241
  %v244 = vadd.f32 %v225, %v241
  %v245 = vadd.f32 %v230, %v241
  %v246 = vadd.f32 %v233, %v241
  %v247 = vmax.f32 %v243, 0.0
  %v248 = vmax.f32 %v244, 0.0
  %v249 = vmax.f32 %v245, 0.0
  %v250 = vmax.f32 %v246, 0.0
  %v251 = vpack.c.bf16 %v248, %v247
  %v252 = vpack.c.bf16 %v250, %v249
  %v253 = vld [vmem:[%s4] sm:$0xf]
  %v254 = vld [vmem:[%s4 + $0x4] sm:$0xf]
  %v255 = vld [vmem:[%s4 + $0x8] sm:$0xf]
  %v256 = vld [vmem:[%s4 + $0xc] sm:$0xf]
  %v257 = vld [vmem:[%s4 + $0x10] sm:$0xf]
  %v258 = vld [vmem:[%s4 + $0x14] sm:$0xf]
  %v259 = vld [vmem:[%s4 + $0x18] sm:$0xf]
  %v260 = vld [vmem:[%s4 + $0x1c] sm:$0xf]
  %v261 = vld [vmem:[%s4 + $0x20] sm:$0xf]
  %v262 = vld [vmem:[%s4 + $0x24] sm:$0xf]
  %v263 = vld [vmem:[%s4 + $0x28] sm:$0xf]
  %v264 = vld [vmem:[%s4 + $0x2c] sm:$0xf]
  %v265 = vld [vmem:[%s4 + $0x30] sm:$0xf]
  %v266 = vld [vmem:[%s4 + $0x34] sm:$0xf]
  %v267 = vld [vmem:[%s4 + $0x38] sm:$0xf]
  %v268 = vld [vmem:[%s4 + $0x3c] sm:$0xf]
  %v269 = vld [vmem:[%s5] sm:$0x1]
  %v271 = vlaneseq
  %v272 = vshrl.u32 %v271, 7
  %v273 = vsub.s32 0, %v272
  %v274 = vrot.slane %v269, %v273
  %v292 = vunpack.c.l.b16 %v253
  %v293 = vunpack.c.l.b16 %v254
  %v294 = vunpack.c.l.b16 %v255
  %v295 = vunpack.c.l.b16 %v256
  %v296 = vunpack.c.l.b16 %v257
  %v297 = vunpack.c.l.b16 %v258
  %v298 = vunpack.c.l.b16 %v259
  %v299 = vunpack.c.l.b16 %v260
  %v300 = vunpack.c.l.b16 %v261
  %v301 = vunpack.c.l.b16 %v262
  %v302 = vunpack.c.l.b16 %v263
  %v303 = vunpack.c.l.b16 %v264
  %v304 = vunpack.c.l.b16 %v265
  %v305 = vunpack.c.l.b16 %v266
  %v306 = vunpack.c.l.b16 %v267
  %v307 = vunpack.c.l.b16 %v268
  %v308 = vpack.c.b16 %v293, %v292
  %v309 = vpack.c.b16 %v295, %v294
  %v310 = vpack.c.b16 %v297, %v296
  %v311 = vpack.c.b16 %v299, %v298
  %v312 = vpack.c.b16 %v301, %v300
  %v313 = vpack.c.b16 %v303, %v302
  %v314 = vpack.c.b16 %v305, %v304
  %v315 = vpack.c.b16 %v307, %v306
  %324 = vmatprep.subr.bf16.mxu0 0
  %325 = vmatpush1.bf16.msra.mxu0 %v315
  %326 = vmatprep.subr.bf16.mxu0 0
  %327 = vmatpush1.bf16.msra.mxu0 %v314
  %328 = vmatprep.subr.bf16.mxu0 0
  %329 = vmatpush1.bf16.msra.mxu0 %v313
  %330 = vmatprep.subr.bf16.mxu0 0
  %331 = vmatpush1.bf16.msra.mxu0 %v312
  %332 = vmatprep.subr.bf16.mxu0 0
  %333 = vmatpush1.bf16.msra.mxu0 %v311
  %334 = vmatprep.subr.bf16.mxu0 0
  %335 = vmatpush1.bf16.msra.mxu0 %v310
  %336 = vmatprep.subr.bf16.mxu0 0
  %337 = vmatpush1.bf16.msra.mxu0 %v309
  %338 = vmatprep.subr.bf16.mxu0 0
  %339 = vmatpush1.bf16.msra.mxu0 %v308
  %340 = vmatprep.subr.bf16.mxu0 0
  %341 = vmatpush2.bf16.msra.mxu0 0
  %342 = vmatprep.subr.bf16.mxu0 0
  %343 = vmatpush2.bf16.msra.mxu0 0
  %344 = vmatprep.subr.bf16.mxu0 0
  %345 = vmatpush2.bf16.msra.mxu0 0
  %346 = vmatprep.subr.bf16.mxu0 0
  %347 = vmatpush2.bf16.msra.mxu0 0
  %348 = vmatprep.subr.bf16.mxu0 0
  %349 = vmatpush2.bf16.msra.mxu0 0
  %350 = vmatprep.subr.bf16.mxu0 0
  %351 = vmatpush2.bf16.msra.mxu0 0
  %352 = vmatprep.subr.bf16.mxu0 0
  %353 = vmatpush2.bf16.msra.mxu0 0
  %354 = vmatprep.subr.bf16.mxu0 0
  %355 = vmatpush2.bf16.msra.mxu0 0
  %356 = vmatprep.mubr.bf16.mxu0 0
  %357 = vmatmul.mubr.bf16.gmra.mxu0 %v251
  %v358 = vpop.f32.mrf.mxu0
  %v359 = vadd.f32 %v274, %v358
  %v360 = vpop.f32.mrf.mxu0
  %v361 = vpop.f32.mrf.mxu0
  %v362 = vadd.f32 %v274, %v361
  %v363 = vpop.f32.mrf.mxu0
  %364 = vmatprep.mubr.bf16.mxu0 0
  %365 = vmatmul.mubr.bf16.gmra.mxu0 %v252
  %v366 = vpop.f32.mrf.mxu0
  %v367 = vadd.f32 %v274, %v366
  %v368 = vpop.f32.mrf.mxu0
  %v369 = vpop.f32.mrf.mxu0
  %v370 = vadd.f32 %v274, %v369
  %v371 = vpop.f32.mrf.mxu0
  %372 = vdwg.mxu0
  %v373 = vmax.f32 %v359, 0.0
  %v374 = vmax.f32 %v362, 0.0
  %v375 = vmax.f32 %v367, 0.0
  %v376 = vmax.f32 %v370, 0.0
  %v377 = vpack.c.bf16 %v374, %v373
  %v378 = vpack.c.bf16 %v376, %v375
  %v379 = vld [vmem:[%s6] sm:$0xf]
  %v380 = vld [vmem:[%s6 + $0x4] sm:$0xf]
  %v381 = vld [vmem:[%s6 + $0x8] sm:$0xf]
  %v382 = vld [vmem:[%s6 + $0xc] sm:$0xf]
  %v383 = vld [vmem:[%s6 + $0x10] sm:$0xf]
  %v384 = vld [vmem:[%s6 + $0x14] sm:$0xf]
  %v385 = vld [vmem:[%s6 + $0x18] sm:$0xf]
  %v386 = vld [vmem:[%s6 + $0x1c] sm:$0xf]
  %v387 = vld [vmem:[%s6 + $0x20] sm:$0xf]
  %v388 = vld [vmem:[%s6 + $0x24] sm:$0xf]
  %v389 = vld [vmem:[%s6 + $0x28] sm:$0xf]
  %v390 = vld [vmem:[%s6 + $0x2c] sm:$0xf]
  %v391 = vld [vmem:[%s6 + $0x30] sm:$0xf]
  %v392 = vld [vmem:[%s6 + $0x34] sm:$0xf]
  %v393 = vld [vmem:[%s6 + $0x38] sm:$0xf]
  %v394 = vld [vmem:[%s6 + $0x3c] sm:$0xf]
  %v395 = vld [vmem:[%s7] sm:$0x1]
  %v397 = vlaneseq
  %v398 = vshrl.u32 %v397, 7
  %v399 = vsub.s32 0, %v398
  %v400 = vrot.slane %v395, %v399
  %v418 = vunpack.c.l.b16 %v379
  %v419 = vunpack.c.l.b16 %v380
  %v420 = vunpack.c.l.b16 %v381
  %v421 = vunpack.c.l.b16 %v382
  %v422 = vunpack.c.l.b16 %v383
  %v423 = vunpack.c.l.b16 %v384
  %v424 = vunpack.c.l.b16 %v385
  %v425 = vunpack.c.l.b16 %v386
  %v426 = vunpack.c.l.b16 %v387
  %v427 = vunpack.c.l.b16 %v388
  %v428 = vunpack.c.l.b16 %v389
  %v429 = vunpack.c.l.b16 %v390
  %v430 = vunpack.c.l.b16 %v391
  %v431 = vunpack.c.l.b16 %v392
  %v432 = vunpack.c.l.b16 %v393
  %v433 = vunpack.c.l.b16 %v394
  %v434 = vpack.c.b16 %v419, %v418
  %v435 = vpack.c.b16 %v421, %v420
  %v436 = vpack.c.b16 %v423, %v422
  %v437 = vpack.c.b16 %v425, %v424
  %v438 = vpack.c.b16 %v427, %v426
  %v439 = vpack.c.b16 %v429, %v428
  %v440 = vpack.c.b16 %v431, %v430
  %v441 = vpack.c.b16 %v433, %v432
  %450 = vmatprep.subr.bf16.mxu0 0
  %451 = vmatpush1.bf16.msra.mxu0 %v441
  %452 = vmatprep.subr.bf16.mxu0 0
  %453 = vmatpush1.bf16.msra.mxu0 %v440
  %454 = vmatprep.subr.bf16.mxu0 0
  %455 = vmatpush1.bf16.msra.mxu0 %v439
  %456 = vmatprep.subr.bf16.mxu0 0
  %457 = vmatpush1.bf16.msra.mxu0 %v438
  %458 = vmatprep.subr.bf16.mxu0 0
  %459 = vmatpush1.bf16.msra.mxu0 %v437
  %460 = vmatprep.subr.bf16.mxu0 0
  %461 = vmatpush1.bf16.msra.mxu0 %v436
  %462 = vmatprep.subr.bf16.mxu0 0
  %463 = vmatpush1.bf16.msra.mxu0 %v435
  %464 = vmatprep.subr.bf16.mxu0 0
  %465 = vmatpush1.bf16.msra.mxu0 %v434
  %466 = vmatprep.subr.bf16.mxu0 0
  %467 = vmatpush2.bf16.msra.mxu0 0
  %468 = vmatprep.subr.bf16.mxu0 0
  %469 = vmatpush2.bf16.msra.mxu0 0
  %470 = vmatprep.subr.bf16.mxu0 0
  %471 = vmatpush2.bf16.msra.mxu0 0
  %472 = vmatprep.subr.bf16.mxu0 0
  %473 = vmatpush2.bf16.msra.mxu0 0
  %474 = vmatprep.subr.bf16.mxu0 0
  %475 = vmatpush2.bf16.msra.mxu0 0
  %476 = vmatprep.subr.bf16.mxu0 0
  %477 = vmatpush2.bf16.msra.mxu0 0
  %478 = vmatprep.subr.bf16.mxu0 0
  %479 = vmatpush2.bf16.msra.mxu0 0
  %480 = vmatprep.subr.bf16.mxu0 0
  %481 = vmatpush2.bf16.msra.mxu0 0
  %482 = vmatprep.mubr.bf16.mxu0 0
  %483 = vmatmul.mubr.bf16.gmra.mxu0 %v377
  %v484 = vpop.f32.mrf.mxu0
  %v485 = vadd.f32 %v400, %v484
  %v486 = vpop.f32.mrf.mxu0
  %v487 = vpop.f32.mrf.mxu0
  %v488 = vadd.f32 %v400, %v487
  %v489 = vpop.f32.mrf.mxu0
  %490 = vmatprep.mubr.bf16.mxu0 0
  %491 = vmatmul.mubr.bf16.gmra.mxu0 %v378
  %v492 = vpop.f32.mrf.mxu0
  %v493 = vadd.f32 %v400, %v492
  %v494 = vpop.f32.mrf.mxu0
  %v495 = vpop.f32.mrf.mxu0
  %v496 = vadd.f32 %v400, %v495
  %v497 = vpop.f32.mrf.mxu0
  %498 = vdwg.mxu0
  %vm499 = vcmask 23552
  %500 = vst.msk [vmem:[%s8] sm:$0xff] %vm499, %v485
  %501 = vst.msk [vmem:[%s8 + $0x8] sm:$0xff] %vm499, %v488
  %502 = vst.msk [vmem:[%s8 + $0x10] sm:$0xff] %vm499, %v493
  %503 = vst.msk [vmem:[%s8 + $0x18] sm:$0xff] %vm499, %v496
  // Predicated region
  $region34: #{_vae_forward_one.3} parent=0 // pred_check
    _
  $region35: #{_vae_forward_one.3} parent=0 // pred_check_branch
    %505 = sbr.rel (0) target = $region37
  $region36: #{_vae_forward_one.3} parent=0 // pred_region
    _
  $region37: #{_vae_forward_one.3} parent=0 // pred_fallthru
    _
  // Predicated region
  $region38: #{_vae_forward_one.3} parent=0 // pred_check
    _
  $region39: #{_vae_forward_one.3} parent=0 // pred_check_branch
    %507 = sbr.rel (0) target = $region41
  $region40: #{_vae_forward_one.3} parent=0 // pred_region
    _
  $region41: #{_vae_forward_one.3} parent=0 // pred_fallthru
    _

// kernel: _vae_forward_one.2
$region0: #{_vae_forward_one.2}
  #allocation0 [shape = 'u32[]', space=smem, size = 0x4, offset = 0x4, fixed_abs, tag = 'smem constant byte address 0x4 - core index']
  #allocation1 [shape = 'u32[144,128]{1,0:T(1,128)}', space=vmem, size = 0x12000, scoped, tag = 'internal scratch']
  #allocation2 [shape = 'f32[2,4]{1,0:T(2,128)}', space=vmem, size = 0x400, scoped, tag = 'scratch operand']
  #allocation3 [shape = 'f32[2,1]{1,0:T(2,128)}', space=vmem, size = 0x400, scoped, tag = 'scratch operand']
  #allocation4 [shape = 'f32[1,1]{1,0:T(1,128)S(1)}', space=vmem, size = 0x200, scoped, tag = 'scoped memory for _vae_forward_one.2']
  %s0 = inlined_call_operand.vmem [shape: f32[128,4], index: 0, kind: input, shape index: {}]
  %s1 = inlined_call_operand.vmem [shape: s32[1,128], index: 1, kind: input, shape index: {}]
  %s2 = inlined_call_operand.vmem [shape: f32[2,32], index: 2, kind: input, shape index: {}]
  %s3 = inlined_call_operand.vmem [shape: f32[4,64], index: 3, kind: input, shape index: {}]
  %s4 = inlined_call_operand.vmem [shape: f32[1,64], index: 4, kind: input, shape index: {}]
  %s5 = inlined_call_operand.vmem [shape: f32[64,32], index: 5, kind: input, shape index: {}]
  %s6 = inlined_call_operand.vmem [shape: f32[1,32], index: 6, kind: input, shape index: {}]
  %s7 = inlined_call_operand.vmem [shape: f32[32,32], index: 7, kind: input, shape index: {}]
  %s8 = inlined_call_operand.vmem [shape: f32[1,32], index: 8, kind: input, shape index: {}]
  %s9 = inlined_call_operand.vmem [shape: f32[32,32], index: 9, kind: input, shape index: {}]
  %s10 = inlined_call_operand.vmem [shape: f32[1,32], index: 10, kind: input, shape index: {}]
  %s11 = inlined_call_operand.vmem [shape: f32[32,64], index: 11, kind: input, shape index: {}]
  %s12 = inlined_call_operand.vmem [shape: f32[1,64], index: 12, kind: input, shape index: {}]
  %s13 = inlined_call_operand.vmem [shape: f32[128,64], index: 13, kind: input, shape index: {}]
  %s14 = inlined_call_operand.vmem [shape: f32[2,64], index: 14, kind: input, shape index: {}]
  %s15 = inlined_call_operand.vmem [shape: f32[64,1], index: 15, kind: input, shape index: {}]
  %s16 = inlined_call_operand.<no memory space> [shape: f32[1,1], index: 16, kind: input, shape index: {}]
  %s17 = inlined_call_operand.vmem [shape: f32[32,128], index: 17, kind: input, shape index: {}]
  %s18 = inlined_call_operand.hbm [shape: f32[2,32], index: 18, kind: output, shape index: {0}]
  %s19 = inlined_call_operand.hbm [shape: f32[2,32], index: 19, kind: output, shape index: {1}]
  %s20 = inlined_call_operand.vmem [shape: f32[2,1], index: 20, kind: output, shape index: {2}]
  %s21 = inlined_call_operand.vmem [shape: f32[2,128], index: 21, kind: output, shape index: {3}]
  %22 = xla_tuple %s18, %s19, %s20, %s21
  %s23 = sld [smem:[#allocation0]]
  $region114: #{_vae_forward_one.2} parent=0
    _
  %s25 = ssub.s32 1, %s23
  %s26 = scalar_select 0, %s25, %s23
  %v27 = vstv %s16
  %28 = vst [vmem:[#allocation4] sm:$0x1] %v27
  $region1: #{_vae_forward_one.2} parent=0
    #allocation5 [shape = 'u8[1024]{0}', space=vmem, size = 0x400, scoped, tag = 'output window, operand 0, single buffered']
    #allocation6 [shape = 's32[1]{0}', space=sflag, size = 0x4, scoped, tag = 'scoped memory for _vae_forward_one.2']
    #allocation7 [shape = 'u8[1024]{0}', space=vmem, size = 0x400, scoped, tag = 'output window, operand 1, single buffered']
    #allocation8 [shape = 's32[1]{0}', space=sflag, size = 0x4, scoped, tag = 'scoped memory for _vae_forward_one.2']
    %29 = vsyncpa [#allocation6], 0
    %30 = vsyncpa [#allocation8], 0
    // Predicated region
    $region2: #{_vae_forward_one.2} parent=1 // pred_check
      _
    $region3: #{_vae_forward_one.2} parent=1 // pred_check_branch
      %32 = sbr.rel (0) target = $region5
    $region4: #{_vae_forward_one.2} parent=1 // pred_region
      _
    $region5: #{_vae_forward_one.2} parent=1 // pred_fallthru
      _
    // Predicated region
    $region6: #{_vae_forward_one.2} parent=1 // pred_check
      _
    $region7: #{_vae_forward_one.2} parent=1 // pred_check_branch
      %34 = sbr.rel (0) target = $region9
    $region8: #{_vae_forward_one.2} parent=1 // pred_region
      _
    $region9: #{_vae_forward_one.2} parent=1 // pred_fallthru
      _
    // Predicated region
    $region10: #{_vae_forward_one.2} parent=1 // pred_check
      _
    $region11: #{_vae_forward_one.2} parent=1 // pred_check_branch
      %36 = sbr.rel (0) target = $region13
    $region12: #{_vae_forward_one.2} parent=1 // pred_region
      _
    $region13: #{_vae_forward_one.2} parent=1 // pred_fallthru
      _
    // Predicated region
    $region14: #{_vae_forward_one.2} parent=1 // pred_check
      _
    $region15: #{_vae_forward_one.2} parent=1 // pred_check_branch
      %38 = sbr.rel (0) target = $region17
    $region16: #{_vae_forward_one.2} parent=1 // pred_region
      _
    $region17: #{_vae_forward_one.2} parent=1 // pred_fallthru
      _
    // Predicated region
    $region18: #{_vae_forward_one.2} parent=1 // pred_check
      _
    $region19: #{_vae_forward_one.2} parent=1 // pred_check_branch
      %40 = sbr.rel (0) target = $region21
    $region20: #{_vae_forward_one.2} parent=1 // pred_region
      _
    $region21: #{_vae_forward_one.2} parent=1 // pred_fallthru
      _
    // Predicated region
    $region22: #{_vae_forward_one.2} parent=1 // pred_check
      _
    $region23: #{_vae_forward_one.2} parent=1 // pred_check_branch
      %42 = sbr.rel (0) target = $region25
    $region24: #{_vae_forward_one.2} parent=1 // pred_region
      _
    $region25: #{_vae_forward_one.2} parent=1 // pred_fallthru
      _
    // Predicated region
    $region26: #{_vae_forward_one.2} parent=1 // pred_check
      _
    $region27: #{_vae_forward_one.2} parent=1 // pred_check_branch
      %44 = sbr.rel (0) target = $region29
    $region28: #{_vae_forward_one.2} parent=1 // pred_region
      _
    $region29: #{_vae_forward_one.2} parent=1 // pred_fallthru
      _
    // Predicated region
    $region30: #{_vae_forward_one.2} parent=1 // pred_check
      _
    $region31: #{_vae_forward_one.2} parent=1 // pred_check_branch
      %46 = sbr.rel (0) target = $region33
    $region32: #{_vae_forward_one.2} parent=1 // pred_region
      _
    $region33: #{_vae_forward_one.2} parent=1 // pred_fallthru
      _
    // Predicated region
    $region34: #{_vae_forward_one.2} parent=1 // pred_check
      _
    $region35: #{_vae_forward_one.2} parent=1 // pred_check_branch
      %48 = sbr.rel (0) target = $region37
    $region36: #{_vae_forward_one.2} parent=1 // pred_region
      _
    $region37: #{_vae_forward_one.2} parent=1 // pred_fallthru
      _
    // Predicated region
    $region38: #{_vae_forward_one.2} parent=1 // pred_check
      _
    $region39: #{_vae_forward_one.2} parent=1 // pred_check_branch
      %50 = sbr.rel (0) target = $region41
    $region40: #{_vae_forward_one.2} parent=1 // pred_region
      _
    $region41: #{_vae_forward_one.2} parent=1 // pred_fallthru
      _
    // Predicated region
    $region42: #{_vae_forward_one.2} parent=1 // pred_check
      _
    $region43: #{_vae_forward_one.2} parent=1 // pred_check_branch
      %52 = sbr.rel (0) target = $region45
    $region44: #{_vae_forward_one.2} parent=1 // pred_region
      _
    $region45: #{_vae_forward_one.2} parent=1 // pred_fallthru
      _
    // Predicated region
    $region46: #{_vae_forward_one.2} parent=1 // pred_check
      _
    $region47: #{_vae_forward_one.2} parent=1 // pred_check_branch
      %54 = sbr.rel (0) target = $region49
    $region48: #{_vae_forward_one.2} parent=1 // pred_region
      _
    $region49: #{_vae_forward_one.2} parent=1 // pred_fallthru
      _
    // Predicated region
    $region50: #{_vae_forward_one.2} parent=1 // pred_check
      _
    $region51: #{_vae_forward_one.2} parent=1 // pred_check_branch
      %56 = sbr.rel (0) target = $region53
    $region52: #{_vae_forward_one.2} parent=1 // pred_region
      _
    $region53: #{_vae_forward_one.2} parent=1 // pred_fallthru
      _
    // Predicated region
    $region54: #{_vae_forward_one.2} parent=1 // pred_check
      _
    $region55: #{_vae_forward_one.2} parent=1 // pred_check_branch
      %58 = sbr.rel (0) target = $region57
    $region56: #{_vae_forward_one.2} parent=1 // pred_region
      _
    $region57: #{_vae_forward_one.2} parent=1 // pred_fallthru
      _
    // Predicated region
    $region58: #{_vae_forward_one.2} parent=1 // pred_check
      _
    $region59: #{_vae_forward_one.2} parent=1 // pred_check_branch
      %60 = sbr.rel (0) target = $region61
    $region60: #{_vae_forward_one.2} parent=1 // pred_region
      _
    $region61: #{_vae_forward_one.2} parent=1 // pred_fallthru
      _
    // Predicated region
    $region62: #{_vae_forward_one.2} parent=1 // pred_check
      _
    $region63: #{_vae_forward_one.2} parent=1 // pred_check_branch
      %62 = sbr.rel (0) target = $region65
    $region64: #{_vae_forward_one.2} parent=1 // pred_region
      _
    $region65: #{_vae_forward_one.2} parent=1 // pred_fallthru
      _
    // Predicated region
    $region66: #{_vae_forward_one.2} parent=1 // pred_check
      _
    $region67: #{_vae_forward_one.2} parent=1 // pred_check_branch
      %64 = sbr.rel (0) target = $region69
    $region68: #{_vae_forward_one.2} parent=1 // pred_region
      _
    $region69: #{_vae_forward_one.2} parent=1 // pred_fallthru
      _
    // Predicated region
    $region70: #{_vae_forward_one.2} parent=1 // pred_check
      _
    $region71: #{_vae_forward_one.2} parent=1 // pred_check_branch
      %66 = sbr.rel (0) target = $region73
    $region72: #{_vae_forward_one.2} parent=1 // pred_region
      _
    $region73: #{_vae_forward_one.2} parent=1 // pred_fallthru
      _
    %p67 = scmp.eq.s32.totalorder 0, 0
    // Predicated region
    $region74: #{_vae_forward_one.2} parent=1 // pred_check
      %p68 = pneg %p67
    $region75: #{_vae_forward_one.2} parent=1 // pred_check_branch
      %70 = sbr.rel (%p68) target = $region77
    $region76: #{_vae_forward_one.2} parent=1 // pred_region
      %vm71 = vcmask 25600
      %72 = vst.msk [vmem:[#allocation2] sm:$0x3] %vm71, 0.0
      %vm73 = vcmask 1024
      %74 = vst.msk [vmem:[#allocation3] sm:$0x3] %vm73, 0.0
    $region77: #{_vae_forward_one.2} parent=1 // pred_fallthru
      _
    %v75 = vld [vmem:[%s0] sm:$0xff]
    %v76 = vld [vmem:[%s0 + $0x8] sm:$0xff]
    %v77 = vld [vmem:[%s0 + $0x10] sm:$0xff]
    %v78 = vld [vmem:[%s0 + $0x18] sm:$0xff]
    %v79 = vld [vmem:[%s0 + $0x20] sm:$0xff]
    %v80 = vld [vmem:[%s0 + $0x28] sm:$0xff]
    %v81 = vld [vmem:[%s0 + $0x30] sm:$0xff]
    %v82 = vld [vmem:[%s0 + $0x38] sm:$0xff]
    %v83 = vld [vmem:[%s0 + $0x40] sm:$0xff]
    %v84 = vld [vmem:[%s0 + $0x48] sm:$0xff]
    %v85 = vld [vmem:[%s0 + $0x50] sm:$0xff]
    %v86 = vld [vmem:[%s0 + $0x58] sm:$0xff]
    %v87 = vld [vmem:[%s0 + $0x60] sm:$0xff]
    %v88 = vld [vmem:[%s0 + $0x68] sm:$0xff]
    %v89 = vld [vmem:[%s0 + $0x70] sm:$0xff]
    %v90 = vld [vmem:[%s0 + $0x78] sm:$0xff]
    %v91 = vld [vmem:[%s1] sm:$0x1]
    %v92 = vlaneseq
    %v93 = vshrl.u32 %v92, 7
    %v94 = vlaneseq
    %v95 = vshrl.u32 %v94, 7
    %v96 = vsub.s32 0, %v95
    %v97 = vrot.slane %v91, %v96
    %vm98 = vcmp.eq.s32.totalorder %v93, %v97
    %v99 = vsel %vm98, 1, 0
    %v100 = vcvt.s32.f32 %v99
    %v101 = vld [vmem:[#allocation2] sm:$0x3]
    %102 = vmatprep.subr.mxu0 0.0
    %103 = vmatpush1.msra.mxu0 %v90
    %104 = vmatprep.subr.mxu0 0.0
    %105 = vmatpush1.msra.mxu0 %v89
    %106 = vmatprep.subr.mxu0 0.0
    %107 = vmatpush1.msra.mxu0 %v88
    %108 = vmatprep.subr.mxu0 0.0
    %109 = vmatpush1.msra.mxu0 %v87
    %110 = vmatprep.subr.mxu0 0.0
    %111 = vmatpush1.msra.mxu0 %v86
    %112 = vmatprep.subr.mxu0 0.0
    %113 = vmatpush1.msra.mxu0 %v85
    %114 = vmatprep.subr.mxu0 0.0
    %115 = vmatpush1.msra.mxu0 %v84
    %116 = vmatprep.subr.mxu0 0.0
    %117 = vmatpush1.msra.mxu0 %v83
    %118 = vmatprep.subr.mxu0 0.0
    %119 = vmatpush1.msra.mxu0 %v82
    %120 = vmatprep.subr.mxu0 0.0
    %121 = vmatpush1.msra.mxu0 %v81
    %122 = vmatprep.subr.mxu0 0.0
    %123 = vmatpush1.msra.mxu0 %v80
    %124 = vmatprep.subr.mxu0 0.0
    %125 = vmatpush1.msra.mxu0 %v79
    %126 = vmatprep.subr.mxu0 0.0
    %127 = vmatpush1.msra.mxu0 %v78
    %128 = vmatprep.subr.mxu0 0.0
    %129 = vmatpush1.msra.mxu0 %v77
    %130 = vmatprep.subr.mxu0 0.0
    %131 = vmatpush1.msra.mxu0 %v76
    %132 = vmatprep.subr.mxu0 0.0
    %133 = vmatpush1.msra.mxu0 %v75
    %134 = vmatprep.subr.mxu0 0.0
    %135 = vmatpush2.msra.mxu0 0.0
    %136 = vmatprep.subr.mxu0 0.0
    %137 = vmatpush2.msra.mxu0 0.0
    %138 = vmatprep.subr.mxu0 0.0
    %139 = vmatpush2.msra.mxu0 0.0
    %140 = vmatprep.subr.mxu0 0.0
    %141 = vmatpush2.msra.mxu0 0.0
    %142 = vmatprep.subr.mxu0 0.0
    %143 = vmatpush2.msra.mxu0 0.0
    %144 = vmatprep.subr.mxu0 0.0
    %145 = vmatpush2.msra.mxu0 0.0
    %146 = vmatprep.subr.mxu0 0.0
    %147 = vmatpush2.msra.mxu0 0.0
    %148 = vmatprep.subr.mxu0 0.0
    %149 = vmatpush2.msra.mxu0 0.0
    %150 = vmatprep.subr.mxu0 0.0
    %151 = vmatpush2.msra.mxu0 0.0
    %152 = vmatprep.subr.mxu0 0.0
    %153 = vmatpush2.msra.mxu0 0.0
    %154 = vmatprep.subr.mxu0 0.0
    %155 = vmatpush2.msra.mxu0 0.0
    %156 = vmatprep.subr.mxu0 0.0
    %157 = vmatpush2.msra.mxu0 0.0
    %158 = vmatprep.subr.mxu0 0.0
    %159 = vmatpush2.msra.mxu0 0.0
    %160 = vmatprep.subr.mxu0 0.0
    %161 = vmatpush2.msra.mxu0 0.0
    %162 = vmatprep.subr.mxu0 0.0
    %163 = vmatpush2.msra.mxu0 0.0
    %164 = vmatprep.subr.mxu0 0.0
    %165 = vmatpush2.msra.mxu0 0.0
    %166 = vmatprep.mubr.f32.mxu0 0.0
    %167 = vmatmul.mubr.f32.gmra.mxu0 %v100
    %v168 = vpop.f32.mrf.mxu0
    %v169 = vadd.f32 0.0, %v168
    %v170 = vpop.f32.mrf.mxu0
    %171 = vdwg.mxu0
    %v172 = vadd.f32 %v101, %v169
    %vm173 = vcmask 25600
    %174 = vst.msk [vmem:[#allocation2] sm:$0x3] %vm173, %v172
    %v175 = vld [vmem:[#allocation3] sm:$0x3]
    %vm176 = vcmask 1041408
    %v177 = vsel %vm176, %v100, 0.0
    %178 = vadd.xlane.f32.xlu0 %v177
    %v179 = vpop.xlane.xlu0 %178
    %v180 = vadd.f32 %v175, %v179
    %vm181 = vcmask 1024
    %182 = vst.msk [vmem:[#allocation3] sm:$0x3] %vm181, %v180
    // Predicated region
    $region78: #{_vae_forward_one.2} parent=1 // pred_check
      %p183 = pneg %p67
    $region79: #{_vae_forward_one.2} parent=1 // pred_check_branch
      %185 = sbr.rel (%p183) target = $region81
    $region80: #{_vae_forward_one.2} parent=1 // pred_region
      %v186 = vld [vmem:[#allocation3] sm:$0x3]
      %v187 = vmax.f32 %v186, 1.0
      %v188 = vld [vmem:[#allocation2] sm:$0x3]
      %190 = vset.pattern.permute.xlu0 0
      %191 = vperm.xlu0 %190, %v187
      %v192 = vpop.permute.xlu0 %191
      %v194 = vrcp.pop %v192
      %v195 = vmul.f32 %v188, %v194
      %v196 = vld [vmem:[%s3] sm:$0xf]
      %v197 = vld [vmem:[%s4] sm:$0x1]
      %v199 = vlaneseq
      %v200 = vshrl.u32 %v199, 7
      %v201 = vsub.s32 0, %v200
      %v202 = vrot.slane %v197, %v201
      %vm204 = vcmask 31744
      %v206 = vsel %vm204, %v195, 0
      %vm208 = vcmask 1043456
      %v210 = vsel %vm208, %v196, 0
      %212 = vmatprep.subr.mxu0 0.0
      %213 = vmatpush1.msra.mxu0 0.0
      %214 = vmatprep.subr.mxu0 0.0
      %215 = vmatpush1.msra.mxu0 0.0
      %216 = vmatprep.subr.mxu0 0.0
      %217 = vmatpush1.msra.mxu0 0.0
      %218 = vmatprep.subr.mxu0 0.0
      %219 = vmatpush1.msra.mxu0 0.0
      %220 = vmatprep.subr.mxu0 0.0
      %221 = vmatpush1.msra.mxu0 0.0
      %222 = vmatprep.subr.mxu0 0.0
      %223 = vmatpush1.msra.mxu0 0.0
      %224 = vmatprep.subr.mxu0 0.0
      %225 = vmatpush1.msra.mxu0 0.0
      %226 = vmatprep.subr.mxu0 0.0
      %227 = vmatpush1.msra.mxu0 0.0
      %228 = vmatprep.subr.mxu0 0.0
      %229 = vmatpush1.msra.mxu0 0.0
      %230 = vmatprep.subr.mxu0 0.0
      %231 = vmatpush1.msra.mxu0 0.0
      %232 = vmatprep.subr.mxu0 0.0
      %233 = vmatpush1.msra.mxu0 0.0
      %234 = vmatprep.subr.mxu0 0.0
      %235 = vmatpush1.msra.mxu0 0.0
      %236 = vmatprep.subr.mxu0 0.0
      %237 = vmatpush1.msra.mxu0 0.0
      %238 = vmatprep.subr.mxu0 0.0
      %239 = vmatpush1.msra.mxu0 0.0
      %240 = vmatprep.subr.mxu0 0.0
      %241 = vmatpush1.msra.mxu0 0.0
      %242 = vmatprep.subr.mxu0 0.0
      %243 = vmatpush1.msra.mxu0 %v210
      %244 = vmatprep.subr.mxu0 0.0
      %245 = vmatpush2.msra.mxu0 0.0
      %246 = vmatprep.subr.mxu0 0.0
      %247 = vmatpush2.msra.mxu0 0.0
      %248 = vmatprep.subr.mxu0 0.0
      %249 = vmatpush2.msra.mxu0 0.0
      %250 = vmatprep.subr.mxu0 0.0
      %251 = vmatpush2.msra.mxu0 0.0
      %252 = vmatprep.subr.mxu0 0.0
      %253 = vmatpush2.msra.mxu0 0.0
      %254 = vmatprep.subr.mxu0 0.0
      %255 = vmatpush2.msra.mxu0 0.0
      %256 = vmatprep.subr.mxu0 0.0
      %257 = vmatpush2.msra.mxu0 0.0
      %258 = vmatprep.subr.mxu0 0.0
      %259 = vmatpush2.msra.mxu0 0.0
      %260 = vmatprep.subr.mxu0 0.0
      %261 = vmatpush2.msra.mxu0 0.0
      %262 = vmatprep.subr.mxu0 0.0
      %263 = vmatpush2.msra.mxu0 0.0
      %264 = vmatprep.subr.mxu0 0.0
      %265 = vmatpush2.msra.mxu0 0.0
      %266 = vmatprep.subr.mxu0 0.0
      %267 = vmatpush2.msra.mxu0 0.0
      %268 = vmatprep.subr.mxu0 0.0
      %269 = vmatpush2.msra.mxu0 0.0
      %270 = vmatprep.subr.mxu0 0.0
      %271 = vmatpush2.msra.mxu0 0.0
      %272 = vmatprep.subr.mxu0 0.0
      %273 = vmatpush2.msra.mxu0 0.0
      %274 = vmatprep.subr.mxu0 0.0
      %275 = vmatpush2.msra.mxu0 0.0
      %276 = vmatprep.mubr.f32.mxu0 0.0
      %277 = vmatmul.mubr.f32.gmra.mxu0 %v206
      %v278 = vpop.f32.mrf.mxu0
      %v279 = vadd.f32 %v202, %v278
      %v280 = vpop.f32.mrf.mxu0
      %281 = vdwg.mxu0
      %v282 = vmax.f32 %v279, 0.0
      %v283 = vld [vmem:[%s5] sm:$0xff]
      %v284 = vld [vmem:[%s5 + $0x8] sm:$0xff]
      %v285 = vld [vmem:[%s5 + $0x10] sm:$0xff]
      %v286 = vld [vmem:[%s5 + $0x18] sm:$0xff]
      %v287 = vld [vmem:[%s5 + $0x20] sm:$0xff]
      %v288 = vld [vmem:[%s5 + $0x28] sm:$0xff]
      %v289 = vld [vmem:[%s5 + $0x30] sm:$0xff]
      %v290 = vld [vmem:[%s5 + $0x38] sm:$0xff]
      %v291 = vld [vmem:[%s6] sm:$0x1]
      %v293 = vlaneseq
      %v294 = vshrl.u32 %v293, 7
      %v295 = vsub.s32 0, %v294
      %v296 = vrot.slane %v291, %v295
      %vm298 = vcmask 523264
      %v300 = vsel %vm298, %v282, 0
      %302 = vmatprep.subr.mxu0 0.0
      %303 = vmatpush1.msra.mxu0 0.0
      %304 = vmatprep.subr.mxu0 0.0
      %305 = vmatpush1.msra.mxu0 0.0
      %306 = vmatprep.subr.mxu0 0.0
      %307 = vmatpush1.msra.mxu0 0.0
      %308 = vmatprep.subr.mxu0 0.0
      %309 = vmatpush1.msra.mxu0 0.0
      %310 = vmatprep.subr.mxu0 0.0
      %311 = vmatpush1.msra.mxu0 0.0
      %312 = vmatprep.subr.mxu0 0.0
      %313 = vmatpush1.msra.mxu0 0.0
      %314 = vmatprep.subr.mxu0 0.0
      %315 = vmatpush1.msra.mxu0 0.0
      %316 = vmatprep.subr.mxu0 0.0
      %317 = vmatpush1.msra.mxu0 0.0
      %318 = vmatprep.subr.mxu0 0.0
      %319 = vmatpush1.msra.mxu0 %v290
      %320 = vmatprep.subr.mxu0 0.0
      %321 = vmatpush1.msra.mxu0 %v289
      %322 = vmatprep.subr.mxu0 0.0
      %323 = vmatpush1.msra.mxu0 %v288
      %324 = vmatprep.subr.mxu0 0.0
      %325 = vmatpush1.msra.mxu0 %v287
      %326 = vmatprep.subr.mxu0 0.0
      %327 = vmatpush1.msra.mxu0 %v286
      %328 = vmatprep.subr.mxu0 0.0
      %329 = vmatpush1.msra.mxu0 %v285
      %330 = vmatprep.subr.mxu0 0.0
      %331 = vmatpush1.msra.mxu0 %v284
      %332 = vmatprep.subr.mxu0 0.0
      %333 = vmatpush1.msra.mxu0 %v283
      %334 = vmatprep.subr.mxu0 0.0
      %335 = vmatpush2.msra.mxu0 0.0
      %336 = vmatprep.subr.mxu0 0.0
      %337 = vmatpush2.msra.mxu0 0.0
      %338 = vmatprep.subr.mxu0 0.0
      %339 = vmatpush2.msra.mxu0 0.0
      %340 = vmatprep.subr.mxu0 0.0
      %341 = vmatpush2.msra.mxu0 0.0
      %342 = vmatprep.subr.mxu0 0.0
      %343 = vmatpush2.msra.mxu0 0.0
      %344 = vmatprep.subr.mxu0 0.0
      %345 = vmatpush2.msra.mxu0 0.0
      %346 = vmatprep.subr.mxu0 0.0
      %347 = vmatpush2.msra.mxu0 0.0
      %348 = vmatprep.subr.mxu0 0.0
      %349 = vmatpush2.msra.mxu0 0.0
      %350 = vmatprep.subr.mxu0 0.0
      %351 = vmatpush2.msra.mxu0 0.0
      %352 = vmatprep.subr.mxu0 0.0
      %353 = vmatpush2.msra.mxu0 0.0
      %354 = vmatprep.subr.mxu0 0.0
      %355 = vmatpush2.msra.mxu0 0.0
      %356 = vmatprep.subr.mxu0 0.0
      %357 = vmatpush2.msra.mxu0 0.0
      %358 = vmatprep.subr.mxu0 0.0
      %359 = vmatpush2.msra.mxu0 0.0
      %360 = vmatprep.subr.mxu0 0.0
      %361 = vmatpush2.msra.mxu0 0.0
      %362 = vmatprep.subr.mxu0 0.0
      %363 = vmatpush2.msra.mxu0 0.0
      %364 = vmatprep.subr.mxu0 0.0
      %365 = vmatpush2.msra.mxu0 0.0
      %366 = vmatprep.mubr.f32.mxu0 0.0
      %367 = vmatmul.mubr.f32.gmra.mxu0 %v300
      %v368 = vpop.f32.mrf.mxu0
      %v369 = vadd.f32 %v296, %v368
      %v370 = vpop.f32.mrf.mxu0
      %371 = vdwg.mxu0
      %v372 = vld [vmem:[%s7] sm:$0xff]
      %v373 = vld [vmem:[%s7 + $0x8] sm:$0xff]
      %v374 = vld [vmem:[%s7 + $0x10] sm:$0xff]
      %v375 = vld [vmem:[%s7 + $0x18] sm:$0xff]
      %v376 = vld [vmem:[%s8] sm:$0x1]
      %v378 = vlaneseq
      %v379 = vshrl.u32 %v378, 7
      %v380 = vsub.s32 0, %v379
      %v381 = vrot.slane %v376, %v380
      %vm383 = vcmask 261120
      %v385 = vsel %vm383, %v369, 0
      %387 = vmatprep.subr.mxu0 0.0
      %388 = vmatpush1.msra.mxu0 0.0
      %389 = vmatprep.subr.mxu0 0.0
      %390 = vmatpush1.msra.mxu0 0.0
      %391 = vmatprep.subr.mxu0 0.0
      %392 = vmatpush1.msra.mxu0 0.0
      %393 = vmatprep.subr.mxu0 0.0
      %394 = vmatpush1.msra.mxu0 0.0
      %395 = vmatprep.subr.mxu0 0.0
      %396 = vmatpush1.msra.mxu0 0.0
      %397 = vmatprep.subr.mxu0 0.0
      %398 = vmatpush1.msra.mxu0 0.0
      %399 = vmatprep.subr.mxu0 0.0
      %400 = vmatpush1.msra.mxu0 0.0
      %401 = vmatprep.subr.mxu0 0.0
      %402 = vmatpush1.msra.mxu0 0.0
      %403 = vmatprep.subr.mxu0 0.0
      %404 = vmatpush1.msra.mxu0 0.0
      %405 = vmatprep.subr.mxu0 0.0
      %406 = vmatpush1.msra.mxu0 0.0
      %407 = vmatprep.subr.mxu0 0.0
      %408 = vmatpush1.msra.mxu0 0.0
      %409 = vmatprep.subr.mxu0 0.0
      %410 = vmatpush1.msra.mxu0 0.0
      %411 = vmatprep.subr.mxu0 0.0
      %412 = vmatpush1.msra.mxu0 %v375
      %413 = vmatprep.subr.mxu0 0.0
      %414 = vmatpush1.msra.mxu0 %v374
      %415 = vmatprep.subr.mxu0 0.0
      %416 = vmatpush1.msra.mxu0 %v373
      %417 = vmatprep.subr.mxu0 0.0
      %418 = vmatpush1.msra.mxu0 %v372
      %419 = vmatprep.subr.mxu0 0.0
      %420 = vmatpush2.msra.mxu0 0.0
      %421 = vmatprep.subr.mxu0 0.0
      %422 = vmatpush2.msra.mxu0 0.0
      %423 = vmatprep.subr.mxu0 0.0
      %424 = vmatpush2.msra.mxu0 0.0
      %425 = vmatprep.subr.mxu0 0.0
      %426 = vmatpush2.msra.mxu0 0.0
      %427 = vmatprep.subr.mxu0 0.0
      %428 = vmatpush2.msra.mxu0 0.0
      %429 = vmatprep.subr.mxu0 0.0
      %430 = vmatpush2.msra.mxu0 0.0
      %431 = vmatprep.subr.mxu0 0.0
      %432 = vmatpush2.msra.mxu0 0.0
      %433 = vmatprep.subr.mxu0 0.0
      %434 = vmatpush2.msra.mxu0 0.0
      %435 = vmatprep.subr.mxu0 0.0
      %436 = vmatpush2.msra.mxu0 0.0
      %437 = vmatprep.subr.mxu0 0.0
      %438 = vmatpush2.msra.mxu0 0.0
      %439 = vmatprep.subr.mxu0 0.0
      %440 = vmatpush2.msra.mxu0 0.0
      %441 = vmatprep.subr.mxu0 0.0
      %442 = vmatpush2.msra.mxu0 0.0
      %443 = vmatprep.subr.mxu0 0.0
      %444 = vmatpush2.msra.mxu0 0.0
      %445 = vmatprep.subr.mxu0 0.0
      %446 = vmatpush2.msra.mxu0 0.0
      %447 = vmatprep.subr.mxu0 0.0
      %448 = vmatpush2.msra.mxu0 0.0
      %449 = vmatprep.subr.mxu0 0.0
      %450 = vmatpush2.msra.mxu0 0.0
      %451 = vmatprep.mubr.f32.mxu0 0.0
      %452 = vmatmul.mubr.f32.gmra.mxu0 %v385
      %v453 = vpop.f32.mrf.mxu0
      %v454 = vadd.f32 %v381, %v453
      %v455 = vpop.f32.mrf.mxu0
      %456 = vdwg.mxu0
      %v457 = vld [vmem:[%s9] sm:$0xff]
      %v458 = vld [vmem:[%s9 + $0x8] sm:$0xff]
      %v459 = vld [vmem:[%s9 + $0x10] sm:$0xff]
      %v460 = vld [vmem:[%s9 + $0x18] sm:$0xff]
      %v461 = vld [vmem:[%s10] sm:$0x1]
      %v463 = vlaneseq
      %v464 = vshrl.u32 %v463, 7
      %v465 = vsub.s32 0, %v464
      %v466 = vrot.slane %v461, %v465
      %468 = vmatprep.subr.mxu0 0.0
      %469 = vmatpush1.msra.mxu0 0.0
      %470 = vmatprep.subr.mxu0 0.0
      %471 = vmatpush1.msra.mxu0 0.0
      %472 = vmatprep.subr.mxu0 0.0
      %473 = vmatpush1.msra.mxu0 0.0
      %474 = vmatprep.subr.mxu0 0.0
      %475 = vmatpush1.msra.mxu0 0.0
      %476 = vmatprep.subr.mxu0 0.0
      %477 = vmatpush1.msra.mxu0 0.0
      %478 = vmatprep.subr.mxu0 0.0
      %479 = vmatpush1.msra.mxu0 0.0
      %480 = vmatprep.subr.mxu0 0.0
      %481 = vmatpush1.msra.mxu0 0.0
      %482 = vmatprep.subr.mxu0 0.0
      %483 = vmatpush1.msra.mxu0 0.0
      %484 = vmatprep.subr.mxu0 0.0
      %485 = vmatpush1.msra.mxu0 0.0
      %486 = vmatprep.subr.mxu0 0.0
      %487 = vmatpush1.msra.mxu0 0.0
      %488 = vmatprep.subr.mxu0 0.0
      %489 = vmatpush1.msra.mxu0 0.0
      %490 = vmatprep.subr.mxu0 0.0
      %491 = vmatpush1.msra.mxu0 0.0
      %492 = vmatprep.subr.mxu0 0.0
      %493 = vmatpush1.msra.mxu0 %v460
      %494 = vmatprep.subr.mxu0 0.0
      %495 = vmatpush1.msra.mxu0 %v459
      %496 = vmatprep.subr.mxu0 0.0
      %497 = vmatpush1.msra.mxu0 %v458
      %498 = vmatprep.subr.mxu0 0.0
      %499 = vmatpush1.msra.mxu0 %v457
      %500 = vmatprep.subr.mxu0 0.0
      %501 = vmatpush2.msra.mxu0 0.0
      %502 = vmatprep.subr.mxu0 0.0
      %503 = vmatpush2.msra.mxu0 0.0
      %504 = vmatprep.subr.mxu0 0.0
      %505 = vmatpush2.msra.mxu0 0.0
      %506 = vmatprep.subr.mxu0 0.0
      %507 = vmatpush2.msra.mxu0 0.0
      %508 = vmatprep.subr.mxu0 0.0
      %509 = vmatpush2.msra.mxu0 0.0
      %510 = vmatprep.subr.mxu0 0.0
      %511 = vmatpush2.msra.mxu0 0.0
      %512 = vmatprep.subr.mxu0 0.0
      %513 = vmatpush2.msra.mxu0 0.0
      %514 = vmatprep.subr.mxu0 0.0
      %515 = vmatpush2.msra.mxu0 0.0
      %516 = vmatprep.subr.mxu0 0.0
      %517 = vmatpush2.msra.mxu0 0.0
      %518 = vmatprep.subr.mxu0 0.0
      %519 = vmatpush2.msra.mxu0 0.0
      %520 = vmatprep.subr.mxu0 0.0
      %521 = vmatpush2.msra.mxu0 0.0
      %522 = vmatprep.subr.mxu0 0.0
      %523 = vmatpush2.msra.mxu0 0.0
      %524 = vmatprep.subr.mxu0 0.0
      %525 = vmatpush2.msra.mxu0 0.0
      %526 = vmatprep.subr.mxu0 0.0
      %527 = vmatpush2.msra.mxu0 0.0
      %528 = vmatprep.subr.mxu0 0.0
      %529 = vmatpush2.msra.mxu0 0.0
      %530 = vmatprep.subr.mxu0 0.0
      %531 = vmatpush2.msra.mxu0 0.0
      %532 = vmatprep.mubr.f32.mxu0 0.0
      %533 = vmatmul.mubr.f32.gmra.mxu0 %v385
      %v534 = vpop.f32.mrf.mxu0
      %v535 = vadd.f32 %v466, %v534
      %v536 = vpop.f32.mrf.mxu0
      %537 = vdwg.mxu0
      %v538 = vmul.f32 %v535, 0.5
      %v539 = vmul.f32 %v538, 1.442695
      %v540 = vpow.pop %v539
      %v541 = vld [vmem:[%s2] sm:$0x3]
      %v542 = vmul.f32 %v540, %v541
      %v543 = vadd.f32 %v454, %v542
      %v544 = vld [vmem:[%s13] sm:$0xff]
      %v545 = vld [vmem:[%s13 + $0x8] sm:$0xff]
      %v546 = vld [vmem:[%s13 + $0x10] sm:$0xff]
      %v547 = vld [vmem:[%s13 + $0x18] sm:$0xff]
      %v548 = vld [vmem:[%s13 + $0x20] sm:$0xff]
      %v549 = vld [vmem:[%s13 + $0x28] sm:$0xff]
      %v550 = vld [vmem:[%s13 + $0x30] sm:$0xff]
      %v551 = vld [vmem:[%s13 + $0x38] sm:$0xff]
      %v552 = vld [vmem:[%s13 + $0x40] sm:$0xff]
      %v553 = vld [vmem:[%s13 + $0x48] sm:$0xff]
      %v554 = vld [vmem:[%s13 + $0x50] sm:$0xff]
      %v555 = vld [vmem:[%s13 + $0x58] sm:$0xff]
      %v556 = vld [vmem:[%s13 + $0x60] sm:$0xff]
      %v557 = vld [vmem:[%s13 + $0x68] sm:$0xff]
      %v558 = vld [vmem:[%s13 + $0x70] sm:$0xff]
      %v559 = vld [vmem:[%s13 + $0x78] sm:$0xff]
      %v560 = vld [vmem:[%s14] sm:$0x3]
      %v561 = vmax.f32 %v543, 0.0
      %v562 = vand.u32 2147483647, %v543
      %v563 = vsub.f32 0.0, %v562
      %v564 = vmul.f32 %v563, 1.442695
      %v565 = vpow.pop %v564
      %v566 = vadd.f32 %v565, 1.0
      %v567 = vlog2.pop %v566
      %v568 = vmul.f32 %v567, 0.6931472
      %v569 = vmul.f32 -0.5, %v565
      %v570 = vadd.f32 %v569, 1.0
      %v571 = vmul.f32 %v570, %v565
      %v572 = vand.u32 2147483647, %v565
      %vm573 = vcmp.lt.f32.partialorder %v572, 0.0004427343
      %v574 = vsel %vm573, %v571, %v568
      %v575 = vadd.f32 %v561, %v574
      %v576 = vld [vmem:[%s11] sm:$0xff]
      %v577 = vld [vmem:[%s11 + $0x8] sm:$0xff]
      %v578 = vld [vmem:[%s11 + $0x10] sm:$0xff]
      %v579 = vld [vmem:[%s11 + $0x18] sm:$0xff]
      %v580 = vld [vmem:[%s12] sm:$0x1]
      %v582 = vlaneseq
      %v583 = vshrl.u32 %v582, 7
      %v584 = vsub.s32 0, %v583
      %v585 = vrot.slane %v580, %v584
      %v588 = vsel %vm383, %v575, 0
      %590 = vmatprep.subr.mxu0 0.0
      %591 = vmatpush1.msra.mxu0 0.0
      %592 = vmatprep.subr.mxu0 0.0
      %593 = vmatpush1.msra.mxu0 0.0
      %594 = vmatprep.subr.mxu0 0.0
      %595 = vmatpush1.msra.mxu0 0.0
      %596 = vmatprep.subr.mxu0 0.0
      %597 = vmatpush1.msra.mxu0 0.0
      %598 = vmatprep.subr.mxu0 0.0
      %599 = vmatpush1.msra.mxu0 0.0
      %600 = vmatprep.subr.mxu0 0.0
      %601 = vmatpush1.msra.mxu0 0.0
      %602 = vmatprep.subr.mxu0 0.0
      %603 = vmatpush1.msra.mxu0 0.0
      %604 = vmatprep.subr.mxu0 0.0
      %605 = vmatpush1.msra.mxu0 0.0
      %606 = vmatprep.subr.mxu0 0.0
      %607 = vmatpush1.msra.mxu0 0.0
      %608 = vmatprep.subr.mxu0 0.0
      %609 = vmatpush1.msra.mxu0 0.0
      %610 = vmatprep.subr.mxu0 0.0
      %611 = vmatpush1.msra.mxu0 0.0
      %612 = vmatprep.subr.mxu0 0.0
      %613 = vmatpush1.msra.mxu0 0.0
      %614 = vmatprep.subr.mxu0 0.0
      %615 = vmatpush1.msra.mxu0 %v579
      %616 = vmatprep.subr.mxu0 0.0
      %617 = vmatpush1.msra.mxu0 %v578
      %618 = vmatprep.subr.mxu0 0.0
      %619 = vmatpush1.msra.mxu0 %v577
      %620 = vmatprep.subr.mxu0 0.0
      %621 = vmatpush1.msra.mxu0 %v576
      %622 = vmatprep.subr.mxu0 0.0
      %623 = vmatpush2.msra.mxu0 0.0
      %624 = vmatprep.subr.mxu0 0.0
      %625 = vmatpush2.msra.mxu0 0.0
      %626 = vmatprep.subr.mxu0 0.0
      %627 = vmatpush2.msra.mxu0 0.0
      %628 = vmatprep.subr.mxu0 0.0
      %629 = vmatpush2.msra.mxu0 0.0
      %630 = vmatprep.subr.mxu0 0.0
      %631 = vmatpush2.msra.mxu0 0.0
      %632 = vmatprep.subr.mxu0 0.0
      %633 = vmatpush2.msra.mxu0 0.0
      %634 = vmatprep.subr.mxu0 0.0
      %635 = vmatpush2.msra.mxu0 0.0
      %636 = vmatprep.subr.mxu0 0.0
      %637 = vmatpush2.msra.mxu0 0.0
      %638 = vmatprep.subr.mxu0 0.0
      %639 = vmatpush2.msra.mxu0 0.0
      %640 = vmatprep.subr.mxu0 0.0
      %641 = vmatpush2.msra.mxu0 0.0
      %642 = vmatprep.subr.mxu0 0.0
      %643 = vmatpush2.msra.mxu0 0.0
      %644 = vmatprep.subr.mxu0 0.0
      %645 = vmatpush2.msra.mxu0 0.0
      %646 = vmatprep.subr.mxu0 0.0
      %647 = vmatpush2.msra.mxu0 0.0
      %648 = vmatprep.subr.mxu0 0.0
      %649 = vmatpush2.msra.mxu0 0.0
      %650 = vmatprep.subr.mxu0 0.0
      %651 = vmatpush2.msra.mxu0 0.0
      %652 = vmatprep.subr.mxu0 0.0
      %653 = vmatpush2.msra.mxu0 0.0
      %654 = vmatprep.mubr.f32.mxu0 0.0
      %655 = vmatmul.mubr.f32.gmra.mxu0 %v588
      %v656 = vpop.f32.mrf.mxu0
      %v657 = vadd.f32 %v585, %v656
      %v658 = vpop.f32.mrf.mxu0
      %659 = vdwg.mxu0
      %v660 = vmax.f32 %v657, 0.0
      %v661 = vand.u32 2147483647, %v657
      %v662 = vsub.f32 0.0, %v661
      %v663 = vmul.f32 %v662, 1.442695
      %v664 = vpow.pop %v663
      %v665 = vadd.f32 %v664, 1.0
      %v666 = vlog2.pop %v665
      %v667 = vmul.f32 %v666, 0.6931472
      %v668 = vmul.f32 -0.5, %v664
      %v669 = vadd.f32 %v668, 1.0
      %v670 = vmul.f32 %v669, %v664
      %v671 = vand.u32 2147483647, %v664
      %vm672 = vcmp.lt.f32.partialorder %v671, 0.0004427343
      %v673 = vsel %vm672, %v670, %v667
      %v674 = vadd.f32 %v660, %v673
      %v675 = vlaneseq
      %v676 = vshrl.u32 %v675, 7
      %v677 = vsub.s32 0, %v676
      %v678 = vrot.slane %v560, %v677
      %v680 = vsel %vm298, %v674, 0
      %682 = vmatprep.subr.mxu0 0.0
      %683 = vmatpush1.msra.mxu0 0.0
      %684 = vmatprep.subr.mxu0 0.0
      %685 = vmatpush1.msra.mxu0 0.0
      %686 = vmatprep.subr.mxu0 0.0
      %687 = vmatpush1.msra.mxu0 0.0
      %688 = vmatprep.subr.mxu0 0.0
      %689 = vmatpush1.msra.mxu0 0.0
      %690 = vmatprep.subr.mxu0 0.0
      %691 = vmatpush1.msra.mxu0 0.0
      %692 = vmatprep.subr.mxu0 0.0
      %693 = vmatpush1.msra.mxu0 0.0
      %694 = vmatprep.subr.mxu0 0.0
      %695 = vmatpush1.msra.mxu0 0.0
      %696 = vmatprep.subr.mxu0 0.0
      %697 = vmatpush1.msra.mxu0 0.0
      %698 = vmatprep.subr.mxu0 0.0
      %699 = vmatpush1.msra.mxu0 %v551
      %700 = vmatprep.subr.mxu0 0.0
      %701 = vmatpush1.msra.mxu0 %v550
      %702 = vmatprep.subr.mxu0 0.0
      %703 = vmatpush1.msra.mxu0 %v549
      %704 = vmatprep.subr.mxu0 0.0
      %705 = vmatpush1.msra.mxu0 %v548
      %706 = vmatprep.subr.mxu0 0.0
      %707 = vmatpush1.msra.mxu0 %v547
      %708 = vmatprep.subr.mxu0 0.0
      %709 = vmatpush1.msra.mxu0 %v546
      %710 = vmatprep.subr.mxu0 0.0
      %711 = vmatpush1.msra.mxu0 %v545
      %712 = vmatprep.subr.mxu0 0.0
      %713 = vmatpush1.msra.mxu0 %v544
      %714 = vmatprep.subr.mxu0 0.0
      %715 = vmatpush2.msra.mxu0 0.0
      %716 = vmatprep.subr.mxu0 0.0
      %717 = vmatpush2.msra.mxu0 0.0
      %718 = vmatprep.subr.mxu0 0.0
      %719 = vmatpush2.msra.mxu0 0.0
      %720 = vmatprep.subr.mxu0 0.0
      %721 = vmatpush2.msra.mxu0 0.0
      %722 = vmatprep.subr.mxu0 0.0
      %723 = vmatpush2.msra.mxu0 0.0
      %724 = vmatprep.subr.mxu0 0.0
      %725 = vmatpush2.msra.mxu0 0.0
      %726 = vmatprep.subr.mxu0 0.0
      %727 = vmatpush2.msra.mxu0 0.0
      %728 = vmatprep.subr.mxu0 0.0
      %729 = vmatpush2.msra.mxu0 0.0
      %730 = vmatprep.subr.mxu0 0.0
      %731 = vmatpush2.msra.mxu0 0.0
      %732 = vmatprep.subr.mxu0 0.0
      %733 = vmatpush2.msra.mxu0 0.0
      %734 = vmatprep.subr.mxu0 0.0
      %735 = vmatpush2.msra.mxu0 0.0
      %736 = vmatprep.subr.mxu0 0.0
      %737 = vmatpush2.msra.mxu0 0.0
      %738 = vmatprep.subr.mxu0 0.0
      %739 = vmatpush2.msra.mxu0 0.0
      %740 = vmatprep.subr.mxu0 0.0
      %741 = vmatpush2.msra.mxu0 0.0
      %742 = vmatprep.subr.mxu0 0.0
      %743 = vmatpush2.msra.mxu0 0.0
      %744 = vmatprep.subr.mxu0 0.0
      %745 = vmatpush2.msra.mxu0 0.0
      %746 = vmatprep.mubr.f32.mxu0 0.0
      %747 = vmatmul.mubr.f32.gmra.mxu0 %v680
      %v748 = vpop.f32.mrf.mxu0
      %v749 = vadd.f32 %v678, %v748
      %v750 = vpop.f32.mrf.mxu0
      %751 = vdwg.mxu0
      %v752 = vmax.f32 %v749, 0.0
      %v753 = vand.u32 2147483647, %v749
      %v754 = vsub.f32 0.0, %v753
      %v755 = vmul.f32 %v754, 1.442695
      %v756 = vpow.pop %v755
      %v757 = vadd.f32 %v756, 1.0
      %v758 = vlog2.pop %v757
      %v759 = vmul.f32 %v758, 0.6931472
      %v760 = vmul.f32 -0.5, %v756
      %v761 = vadd.f32 %v760, 1.0
      %v762 = vmul.f32 %v761, %v756
      %v763 = vand.u32 2147483647, %v756
      %vm764 = vcmp.lt.f32.partialorder %v763, 0.0004427343
      %v765 = vsel %vm764, %v762, %v759
      %v766 = vadd.f32 %v752, %v765
      %v767 = vlaneseq
      %v768 = vshrl.u32 %v767, 7
      %v769 = vsub.s32 1, %v768
      %v770 = vrot.slane %v560, %v769
      %v772 = vsel %vm298, %v766, 0
      %774 = vmatprep.subr.mxu0 0.0
      %775 = vmatpush1.msra.mxu0 0.0
      %776 = vmatprep.subr.mxu0 0.0
      %777 = vmatpush1.msra.mxu0 0.0
      %778 = vmatprep.subr.mxu0 0.0
      %779 = vmatpush1.msra.mxu0 0.0
      %780 = vmatprep.subr.mxu0 0.0
      %781 = vmatpush1.msra.mxu0 0.0
      %782 = vmatprep.subr.mxu0 0.0
      %783 = vmatpush1.msra.mxu0 0.0
      %784 = vmatprep.subr.mxu0 0.0
      %785 = vmatpush1.msra.mxu0 0.0
      %786 = vmatprep.subr.mxu0 0.0
      %787 = vmatpush1.msra.mxu0 0.0
      %788 = vmatprep.subr.mxu0 0.0
      %789 = vmatpush1.msra.mxu0 0.0
      %790 = vmatprep.subr.mxu0 0.0
      %791 = vmatpush1.msra.mxu0 %v559
      %792 = vmatprep.subr.mxu0 0.0
      %793 = vmatpush1.msra.mxu0 %v558
      %794 = vmatprep.subr.mxu0 0.0
      %795 = vmatpush1.msra.mxu0 %v557
      %796 = vmatprep.subr.mxu0 0.0
      %797 = vmatpush1.msra.mxu0 %v556
      %798 = vmatprep.subr.mxu0 0.0
      %799 = vmatpush1.msra.mxu0 %v555
      %800 = vmatprep.subr.mxu0 0.0
      %801 = vmatpush1.msra.mxu0 %v554
      %802 = vmatprep.subr.mxu0 0.0
      %803 = vmatpush1.msra.mxu0 %v553
      %804 = vmatprep.subr.mxu0 0.0
      %805 = vmatpush1.msra.mxu0 %v552
      %806 = vmatprep.subr.mxu0 0.0
      %807 = vmatpush2.msra.mxu0 0.0
      %808 = vmatprep.subr.mxu0 0.0
      %809 = vmatpush2.msra.mxu0 0.0
      %810 = vmatprep.subr.mxu0 0.0
      %811 = vmatpush2.msra.mxu0 0.0
      %812 = vmatprep.subr.mxu0 0.0
      %813 = vmatpush2.msra.mxu0 0.0
      %814 = vmatprep.subr.mxu0 0.0
      %815 = vmatpush2.msra.mxu0 0.0
      %816 = vmatprep.subr.mxu0 0.0
      %817 = vmatpush2.msra.mxu0 0.0
      %818 = vmatprep.subr.mxu0 0.0
      %819 = vmatpush2.msra.mxu0 0.0
      %820 = vmatprep.subr.mxu0 0.0
      %821 = vmatpush2.msra.mxu0 0.0
      %822 = vmatprep.subr.mxu0 0.0
      %823 = vmatpush2.msra.mxu0 0.0
      %824 = vmatprep.subr.mxu0 0.0
      %825 = vmatpush2.msra.mxu0 0.0
      %826 = vmatprep.subr.mxu0 0.0
      %827 = vmatpush2.msra.mxu0 0.0
      %828 = vmatprep.subr.mxu0 0.0
      %829 = vmatpush2.msra.mxu0 0.0
      %830 = vmatprep.subr.mxu0 0.0
      %831 = vmatpush2.msra.mxu0 0.0
      %832 = vmatprep.subr.mxu0 0.0
      %833 = vmatpush2.msra.mxu0 0.0
      %834 = vmatprep.subr.mxu0 0.0
      %835 = vmatpush2.msra.mxu0 0.0
      %836 = vmatprep.subr.mxu0 0.0
      %837 = vmatpush2.msra.mxu0 0.0
      %838 = vmatprep.mubr.f32.mxu0 0.0
      %839 = vmatmul.mubr.f32.gmra.mxu0 %v772
      %v840 = vpop.f32.mrf.mxu0
      %v841 = vadd.f32 %v770, %v840
      %v842 = vpop.f32.mrf.mxu0
      %843 = vdwg.mxu0
      %v844 = vmax.f32 %v841, 0.0
      %v845 = vand.u32 2147483647, %v841
      %v846 = vsub.f32 0.0, %v845
      %v847 = vmul.f32 %v846, 1.442695
      %v848 = vpow.pop %v847
      %v849 = vadd.f32 %v848, 1.0
      %v850 = vlog2.pop %v849
      %v851 = vmul.f32 %v850, 0.6931472
      %v852 = vmul.f32 -0.5, %v848
      %v853 = vadd.f32 %v852, 1.0
      %v854 = vmul.f32 %v853, %v848
      %v855 = vand.u32 2147483647, %v848
      %vm856 = vcmp.lt.f32.partialorder %v855, 0.0004427343
      %v857 = vsel %vm856, %v854, %v851
      %v858 = vadd.f32 %v844, %v857
      %v859 = vld [vmem:[%s15] sm:$0xff]
      %v860 = vld [vmem:[%s15 + $0x8] sm:$0xff]
      %v861 = vld [vmem:[%s15 + $0x10] sm:$0xff]
      %v862 = vld [vmem:[%s15 + $0x18] sm:$0xff]
      %v863 = vld [vmem:[%s15 + $0x20] sm:$0xff]
      %v864 = vld [vmem:[%s15 + $0x28] sm:$0xff]
      %v865 = vld [vmem:[%s15 + $0x30] sm:$0xff]
      %v866 = vld [vmem:[%s15 + $0x38] sm:$0xff]
      %v867 = vld [vmem:[#allocation4] sm:$0x1]
      %v869 = vlaneseq
      %v870 = vshrl.u32 %v869, 7
      %v871 = vsub.s32 0, %v870
      %v872 = vrot.slane %v867, %v871
      %v875 = vsel %vm298, %v858, 0
      %877 = vmatprep.subr.mxu0 0.0
      %878 = vmatpush1.msra.mxu0 0.0
      %879 = vmatprep.subr.mxu0 0.0
      %880 = vmatpush1.msra.mxu0 0.0
      %881 = vmatprep.subr.mxu0 0.0
      %882 = vmatpush1.msra.mxu0 0.0
      %883 = vmatprep.subr.mxu0 0.0
      %884 = vmatpush1.msra.mxu0 0.0
      %885 = vmatprep.subr.mxu0 0.0
      %886 = vmatpush1.msra.mxu0 0.0
      %887 = vmatprep.subr.mxu0 0.0
      %888 = vmatpush1.msra.mxu0 0.0
      %889 = vmatprep.subr.mxu0 0.0
      %890 = vmatpush1.msra.mxu0 0.0
      %891 = vmatprep.subr.mxu0 0.0
      %892 = vmatpush1.msra.mxu0 0.0
      %893 = vmatprep.subr.mxu0 0.0
      %894 = vmatpush1.msra.mxu0 %v866
      %895 = vmatprep.subr.mxu0 0.0
      %896 = vmatpush1.msra.mxu0 %v865
      %897 = vmatprep.subr.mxu0 0.0
      %898 = vmatpush1.msra.mxu0 %v864
      %899 = vmatprep.subr.mxu0 0.0
      %900 = vmatpush1.msra.mxu0 %v863
      %901 = vmatprep.subr.mxu0 0.0
      %902 = vmatpush1.msra.mxu0 %v862
      %903 = vmatprep.subr.mxu0 0.0
      %904 = vmatpush1.msra.mxu0 %v861
      %905 = vmatprep.subr.mxu0 0.0
      %906 = vmatpush1.msra.mxu0 %v860
      %907 = vmatprep.subr.mxu0 0.0
      %908 = vmatpush1.msra.mxu0 %v859
      %909 = vmatprep.subr.mxu0 0.0
      %910 = vmatpush2.msra.mxu0 0.0
      %911 = vmatprep.subr.mxu0 0.0
      %912 = vmatpush2.msra.mxu0 0.0
      %913 = vmatprep.subr.mxu0 0.0
      %914 = vmatpush2.msra.mxu0 0.0
      %915 = vmatprep.subr.mxu0 0.0
      %916 = vmatpush2.msra.mxu0 0.0
      %917 = vmatprep.subr.mxu0 0.0
      %918 = vmatpush2.msra.mxu0 0.0
      %919 = vmatprep.subr.mxu0 0.0
      %920 = vmatpush2.msra.mxu0 0.0
      %921 = vmatprep.subr.mxu0 0.0
      %922 = vmatpush2.msra.mxu0 0.0
      %923 = vmatprep.subr.mxu0 0.0
      %924 = vmatpush2.msra.mxu0 0.0
      %925 = vmatprep.subr.mxu0 0.0
      %926 = vmatpush2.msra.mxu0 0.0
      %927 = vmatprep.subr.mxu0 0.0
      %928 = vmatpush2.msra.mxu0 0.0
      %929 = vmatprep.subr.mxu0 0.0
      %930 = vmatpush2.msra.mxu0 0.0
      %931 = vmatprep.subr.mxu0 0.0
      %932 = vmatpush2.msra.mxu0 0.0
      %933 = vmatprep.subr.mxu0 0.0
      %934 = vmatpush2.msra.mxu0 0.0
      %935 = vmatprep.subr.mxu0 0.0
      %936 = vmatpush2.msra.mxu0 0.0
      %937 = vmatprep.subr.mxu0 0.0
      %938 = vmatpush2.msra.mxu0 0.0
      %939 = vmatprep.subr.mxu0 0.0
      %940 = vmatpush2.msra.mxu0 0.0
      %941 = vmatprep.mubr.f32.mxu0 0.0
      %942 = vmatmul.mubr.f32.gmra.mxu0 %v875
      %v943 = vpop.f32.mrf.mxu0
      %v944 = vadd.f32 %v872, %v943
      %v945 = vpop.f32.mrf.mxu0
      %946 = vdwg.mxu0
      %vm947 = vcmask 254976
      %948 = vst.msk [vmem:[#allocation5] sm:$0x3] %vm947, %v454
      %949 = vst.msk [vmem:[#allocation7] sm:$0x3] %vm947, %v535
      %950 = vst.msk [vmem:[%s20] sm:$0x3] %vm181, %v944
      %v951 = vld [vmem:[%s17] sm:$0xff]
      %v952 = vld [vmem:[%s17 + $0x8] sm:$0xff]
      %v953 = vld [vmem:[%s17 + $0x10] sm:$0xff]
      %v954 = vld [vmem:[%s17 + $0x18] sm:$0xff]
      %v956 = vsel %vm383, %v454, 0
      %958 = vmatprep.subr.mxu0 0.0
      %959 = vmatpush1.msra.mxu0 0.0
      %960 = vmatprep.subr.mxu0 0.0
      %961 = vmatpush1.msra.mxu0 0.0
      %962 = vmatprep.subr.mxu0 0.0
      %963 = vmatpush1.msra.mxu0 0.0
      %964 = vmatprep.subr.mxu0 0.0
      %965 = vmatpush1.msra.mxu0 0.0
      %966 = vmatprep.subr.mxu0 0.0
      %967 = vmatpush1.msra.mxu0 0.0
      %968 = vmatprep.subr.mxu0 0.0
      %969 = vmatpush1.msra.mxu0 0.0
      %970 = vmatprep.subr.mxu0 0.0
      %971 = vmatpush1.msra.mxu0 0.0
      %972 = vmatprep.subr.mxu0 0.0
      %973 = vmatpush1.msra.mxu0 0.0
      %974 = vmatprep.subr.mxu0 0.0
      %975 = vmatpush1.msra.mxu0 0.0
      %976 = vmatprep.subr.mxu0 0.0
      %977 = vmatpush1.msra.mxu0 0.0
      %978 = vmatprep.subr.mxu0 0.0
      %979 = vmatpush1.msra.mxu0 0.0
      %980 = vmatprep.subr.mxu0 0.0
      %981 = vmatpush1.msra.mxu0 0.0
      %982 = vmatprep.subr.mxu0 0.0
      %983 = vmatpush1.msra.mxu0 %v954
      %984 = vmatprep.subr.mxu0 0.0
      %985 = vmatpush1.msra.mxu0 %v953
      %986 = vmatprep.subr.mxu0 0.0
      %987 = vmatpush1.msra.mxu0 %v952
      %988 = vmatprep.subr.mxu0 0.0
      %989 = vmatpush1.msra.mxu0 %v951
      %990 = vmatprep.subr.mxu0 0.0
      %991 = vmatpush2.msra.mxu0 0.0
      %992 = vmatprep.subr.mxu0 0.0
      %993 = vmatpush2.msra.mxu0 0.0
      %994 = vmatprep.subr.mxu0 0.0
      %995 = vmatpush2.msra.mxu0 0.0
      %996 = vmatprep.subr.mxu0 0.0
      %997 = vmatpush2.msra.mxu0 0.0
      %998 = vmatprep.subr.mxu0 0.0
      %999 = vmatpush2.msra.mxu0 0.0
      %1000 = vmatprep.subr.mxu0 0.0
      %1001 = vmatpush2.msra.mxu0 0.0
      %1002 = vmatprep.subr.mxu0 0.0
      %1003 = vmatpush2.msra.mxu0 0.0
      %1004 = vmatprep.subr.mxu0 0.0
      %1005 = vmatpush2.msra.mxu0 0.0
      %1006 = vmatprep.subr.mxu0 0.0
      %1007 = vmatpush2.msra.mxu0 0.0
      %1008 = vmatprep.subr.mxu0 0.0
      %1009 = vmatpush2.msra.mxu0 0.0
      %1010 = vmatprep.subr.mxu0 0.0
      %1011 = vmatpush2.msra.mxu0 0.0
      %1012 = vmatprep.subr.mxu0 0.0
      %1013 = vmatpush2.msra.mxu0 0.0
      %1014 = vmatprep.subr.mxu0 0.0
      %1015 = vmatpush2.msra.mxu0 0.0
      %1016 = vmatprep.subr.mxu0 0.0
      %1017 = vmatpush2.msra.mxu0 0.0
      %1018 = vmatprep.subr.mxu0 0.0
      %1019 = vmatpush2.msra.mxu0 0.0
      %1020 = vmatprep.subr.mxu0 0.0
      %1021 = vmatpush2.msra.mxu0 0.0
      %1022 = vmatprep.mubr.f32.mxu0 0.0
      %1023 = vmatmul.mubr.f32.gmra.mxu0 %v956
      %v1024 = vpop.f32.mrf.mxu0
      %v1025 = vadd.f32 0.0, %v1024
      %v1026 = vpop.f32.mrf.mxu0
      %1027 = vdwg.mxu0
      %1028 = vst [vmem:[%s21] sm:$0x3] %v1025
    $region81: #{_vae_forward_one.2} parent=1 // pred_fallthru
      _
    // Predicated region
    $region82: #{_vae_forward_one.2} parent=1 // pred_check
      _
    $region83: #{_vae_forward_one.2} parent=1 // pred_check_branch
      %1030 = sbr.rel (0) target = $region85
    $region84: #{_vae_forward_one.2} parent=1 // pred_region
      %s1032 = ssub.s32 32, 32
      %1033 = vsyncadd [#allocation6], %s1032
      %s1035 = sshll.u32 [#allocation5], 4
      %s1036 = int_to_ptr.vmem [resolvable:$true] %s1035
      %1038 = dma.vmem_to_hbm [thread:$0]  %s1036, 32, %s18, [#allocation6]
    $region85: #{_vae_forward_one.2} parent=1 // pred_fallthru
      _
    // Predicated region
    $region86: #{_vae_forward_one.2} parent=1 // pred_check
      _
    $region87: #{_vae_forward_one.2} parent=1 // pred_check_branch
      %1040 = sbr.rel (0) target = $region89
    $region88: #{_vae_forward_one.2} parent=1 // pred_region
      %s1042 = ssub.s32 32, 32
      %1043 = vsyncadd [#allocation8], %s1042
      %s1045 = sshll.u32 [#allocation7], 4
      %s1046 = int_to_ptr.vmem [resolvable:$true] %s1045
      %1048 = dma.vmem_to_hbm [thread:$0]  %s1046, 32, %s19, [#allocation8]
    $region89: #{_vae_forward_one.2} parent=1 // pred_fallthru
      _
    // Predicated region
    $region90: #{_vae_forward_one.2} parent=1 // pred_check
      _
    $region91: #{_vae_forward_one.2} parent=1 // pred_check_branch
      %1050 = sbr.rel (0) target = $region93
    $region92: #{_vae_forward_one.2} parent=1 // pred_region
      _
    $region93: #{_vae_forward_one.2} parent=1 // pred_fallthru
      _
    // Predicated region
    $region94: #{_vae_forward_one.2} parent=1 // pred_check
      _
    $region95: #{_vae_forward_one.2} parent=1 // pred_check_branch
      %1052 = sbr.rel (0) target = $region97
    $region96: #{_vae_forward_one.2} parent=1 // pred_region
      _
    $region97: #{_vae_forward_one.2} parent=1 // pred_fallthru
      _
    // Predicated region
    $region98: #{_vae_forward_one.2} parent=1 // pred_check
      _
    $region99: #{_vae_forward_one.2} parent=1 // pred_check_branch
      %1054 = sbr.rel (0) target = $region101
    $region100: #{_vae_forward_one.2} parent=1 // pred_region
      %1055 = dma.done [#allocation6], 32
    $region101: #{_vae_forward_one.2} parent=1 // pred_fallthru
      _
    // Predicated region
    $region102: #{_vae_forward_one.2} parent=1 // pred_check
      _
    $region103: #{_vae_forward_one.2} parent=1 // pred_check_branch
      %1057 = sbr.rel (0) target = $region105
    $region104: #{_vae_forward_one.2} parent=1 // pred_region
      %1058 = dma.done [#allocation8], 32
    $region105: #{_vae_forward_one.2} parent=1 // pred_fallthru
      _
    // Predicated region
    $region106: #{_vae_forward_one.2} parent=1 // pred_check
      _
    $region107: #{_vae_forward_one.2} parent=1 // pred_check_branch
      %1060 = sbr.rel (0) target = $region109
    $region108: #{_vae_forward_one.2} parent=1 // pred_region
      _
    $region109: #{_vae_forward_one.2} parent=1 // pred_fallthru
      _
    // Predicated region
    $region110: #{_vae_forward_one.2} parent=1 // pred_check
      _
    $region111: #{_vae_forward_one.2} parent=1 // pred_check_branch
      %1062 = sbr.rel (0) target = $region113
    $region112: #{_vae_forward_one.2} parent=1 // pred_region
      _
    $region113: #{_vae_forward_one.2} parent=1 // pred_fallthru
      _
    %1063 = vsyncpa [#allocation6], 1
    %1064 = vsyncpa [#allocation8], 1

</llo_original>
